<compile_context>
chip_gen: v5e
topology: v5e:2x2
jax: 0.10.0
libtpu: 0.0.40
codegen_flags: <defaults>
</compile_context>

<pallas_src>
import functools

import jax
import jax.numpy as jnp
from jax.experimental import pallas as pl
from jax.experimental.pallas import tpu as pltpu


def _round_up(x, m):
    return (x + m - 1) // m * m


def _sigmoid_via_tanh(x):
    # sigmoid(x) == 0.5 * tanh(0.5 * x) + 0.5 : one EUP op + cheap VALU scale/offset.
    return 0.5 * jnp.tanh(0.5 * x) + 0.5


def _lstm_kernel(x_ref, w_ih_ref, w_hh_ref, b_ref, out_ref,
                 gx_scr, h_scr, c_scr,
                 *, seq_len, t_chunk, h_pad, compute_dtype, unroll):
    """One grid step = one chunk of t_chunk timesteps.

    x_ref    : (T_CHUNK, B_pad, D)        time-major input chunk (compute_dtype)
    w_ih_ref : (D, 4*H_pad)               input->gates weights   (compute_dtype)
    w_hh_ref : (H_pad, 4*H_pad)           hidden->gates weights  (compute_dtype)
    b_ref    : (1, 4*H_pad)               b_ih + b_hh            (f32)
    out_ref  : (B_pad, H_pad)             final hidden state     (f32, resident)
    gx_scr   : (T_CHUNK, B_pad, 4*H_pad)  hoisted x-projection   (f32 scratch)
    h_scr/c_scr : (B_pad, H_pad)          recurrent state        (f32 scratch)
    """
    chunk = pl.program_id(0)
    num_chunks = pl.num_programs(0)

    @pl.when(chunk == 0)
    def _():
        h_scr[...] = jnp.zeros_like(h_scr)
        c_scr[...] = jnp.zeros_like(c_scr)

    # ---- Hoisted, non-recurrent input projection: one MXU matmul per chunk ----
    # (T, B_pad, D) -> (T*B_pad, D) keeps the minor (lane) dim and merges a
    # multiple-of-8 sublane group, so it is layout-cheap.
    t_blk, b_pad, d = x_ref.shape
    x2d = x_ref[...].reshape(t_blk * b_pad, d)
    gx = jnp.dot(x2d, w_ih_ref[...], preferred_element_type=jnp.float32)
    gx = gx + b_ref[...]                                  # bias folded in once per chunk
    gx_scr[...] = gx.reshape(t_blk, b_pad, 4 * h_pad)

    # Hoist the weight load out of the serial loop.
    w_hh = w_hh_ref[...]

    def step(t, carry):
        h, c = carry                       # h: compute_dtype, c: f32
        # Serial part: one (B_pad, H_pad) x (H_pad, 4*H_pad) MXU matmul + pointwise.
        gates = gx_scr[t] + jnp.dot(h, w_hh, preferred_element_type=jnp.float32)
        # Gate slices are lane-tile aligned because H_pad % 128 == 0.
        i_g = _sigmoid_via_tanh(gates[:, 0 * h_pad:1 * h_pad])
        f_g = _sigmoid_via_tanh(gates[:, 1 * h_pad:2 * h_pad])
        g_g = jnp.tanh(gates[:, 2 * h_pad:3 * h_pad])
        o_g = _sigmoid_via_tanh(gates[:, 3 * h_pad:4 * h_pad])
        c_new = f_g * c + i_g * g_g                           # f32 accumulation
        h_new = (o_g * jnp.tanh(c_new)).astype(compute_dtype)  # cast once, here
        return (h_new, c_new)

    def run(n_steps):
        # n_steps is a Python int -> static trip count -> partial unroll is legal.
        h0 = h_scr[...].astype(compute_dtype)
        c0 = c_scr[...]
        h, c = jax.lax.fori_loop(0, n_steps, step, (h0, c0),
                                 unroll=int(min(unroll, n_steps)))
        h_scr[...] = h.astype(jnp.float32)
        c_scr[...] = c

    tail = seq_len % t_chunk
    if tail == 0:
        run(t_chunk)
    else:
        # Full chunks run the full static loop; only the last chunk runs the
        # (statically shorter) tail loop -> no dead timesteps, no per-step masking.
        @pl.when(chunk != num_chunks - 1)
        def _():
            run(t_chunk)

        @pl.when(chunk == num_chunks - 1)
        def _():
            run(tail)

    # Constant output block index -> block stays resident in VMEM across chunks and
    # is written back to HBM once; only the last chunk needs to populate it.
    @pl.when(chunk == num_chunks - 1)
    def _():
        out_ref[...] = h_scr[...]


def lstm_model_forward(x, params, compute_dtype=jnp.bfloat16, unroll=8):
    """Forward pass of LSTMModel: single-layer LSTM (batch_first) -> Linear(H,1) -> squeeze(-1).

    x: (B, S, D) float32.  Returns (B,) float32.
    """
    w_ih, w_hh, b, w_fc, b_fc = params
    B, S, D = x.shape
    H = w_hh.shape[0]
    f32 = jnp.float32

    # ---- Padded sizes ----------------------------------------------------------
    H_pad = _round_up(H, 128)              # lane-tile aligned gates -> free slices
    B_pad = _round_up(B, 8)                # full sublanes per vreg
    cd_bytes = jnp.dtype(compute_dtype).itemsize

    # ---- VMEM-budget-derived chunk length + explicit scoped-VMEM limit ----------
    try:
        vmem_cap = int(pltpu.get_tpu_info().vmem_capacity_bytes)
    except Exception:
        vmem_cap = 64 * 1024 * 1024        # conservative fallback (v7x per-core VMEM)
    budget = int(vmem_cap * 0.7)           # headroom for compiler-internal scratch

    fixed_bytes = (
        2 * D * 4 * H_pad * cd_bytes       # w_ih block (double-buffered by default)
        + 2 * H_pad * 4 * H_pad * cd_bytes  # w_hh block
        + 2 * 4 * H_pad * 4                 # bias block
        + 2 * B_pad * H_pad * 4             # output block
        + 2 * B_pad * H_pad * 4             # h / c scratch
    )
    per_t_bytes = (B_pad * 4 * H_pad * 4          # gx scratch (f32)
                   + 2 * B_pad * D * cd_bytes)    # x block (double-buffered)
    t_budget = max((budget - fixed_bytes) // per_t_bytes, 8)
    T_CHUNK = int(min(128, t_budget, _round_up(S, 8)))
    S_pad = _round_up(S, T_CHUNK)
    num_chunks = S_pad // T_CHUNK
    vmem_limit = int(min(vmem_cap,
                         max(fixed_bytes + per_t_bytes * T_CHUNK + (8 << 20),
                             32 << 20)))

    # ---- Gate-blockwise zero-pad of the weights to H_pad (exact for an LSTM) -----
    w_ih_p = jnp.pad(w_ih.reshape(D, 4, H),
                     ((0, 0), (0, 0), (0, H_pad - H))).reshape(D, 4 * H_pad)
    w_hh_p = jnp.pad(w_hh.reshape(H, 4, H),
                     ((0, H_pad - H), (0, 0), (0, H_pad - H))).reshape(H_pad, 4 * H_pad)
    b_p = jnp.pad(b.reshape(1, 4, H),
                  ((0, 0), (0, 0), (0, H_pad - H))).reshape(1, 4 * H_pad)
    w_ih_p = w_ih_p.astype(compute_dtype)   # bf16 weights: MXU rate + half the DMA bytes
    w_hh_p = w_hh_p.astype(compute_dtype)
    b_p = b_p.astype(f32)

    # ---- Time-major, padded, matmul-dtype input (one fused XLA pass over x) ------
    x_tm = jnp.transpose(x, (1, 0, 2))                       # (S, B, D)
    x_tm = jnp.pad(x_tm, ((0, S_pad - S), (0, B_pad - B), (0, 0)))
    x_tm = x_tm.astype(compute_dtype)

    kernel = functools.partial(
        _lstm_kernel,
        seq_len=S, t_chunk=T_CHUNK, h_pad=H_pad,
        compute_dtype=compute_dtype, unroll=unroll)

    h_last = pl.pallas_call(
        kernel,
        out_shape=jax.ShapeDtypeStruct((B_pad, H_pad), f32),
        grid_spec=pltpu.PrefetchScalarGridSpec(
            num_scalar_prefetch=0,
            grid=(num_chunks,),
            in_specs=[
                # x chunk: streamed / double-buffered across the chunk grid.
                pl.BlockSpec((T_CHUNK, B_pad, D), lambda i: (i, 0, 0)),
                # Grid-invariant weights/bias: constant index map -> DMA'd once.
                pl.BlockSpec((D, 4 * H_pad), lambda i: (0, 0)),
                pl.BlockSpec((H_pad, 4 * H_pad), lambda i: (0, 0)),
                pl.BlockSpec((1, 4 * H_pad), lambda i: (0, 0)),
            ],
            out_specs=pl.BlockSpec((B_pad, H_pad), lambda i: (0, 0)),
            scratch_shapes=[
                pltpu.VMEM((T_CHUNK, B_pad, 4 * H_pad), f32),  # hoisted x@W_ih + b
                pltpu.VMEM((B_pad, H_pad), f32),               # h state
                pltpu.VMEM((B_pad, H_pad), f32),               # c state
            ],
        ),
        compiler_params=pltpu.CompilerParams(
            dimension_semantics=("arbitrary",),   # sequential recurrence over chunks
            vmem_limit_bytes=vmem_limit),
    )(x_tm, w_ih_p, w_hh_p, b_p)

    # Final Linear(hidden, 1) + squeeze(-1) on the real (unpadded) rows/units,
    # kept in the wrapper so the kernel output stays lane-dense.
    out = h_last[:B, :H] @ w_fc + b_fc     # (B, 1)
    return out[:, 0]


def init_params(key, input_size, hidden_size):
    """Deterministic params, stored pre-transposed (in_dim, out_dim) for the kernel."""
    k1, k2, k3, k4, k5, k6 = jax.random.split(key, 6)
    bound = 1.0 / jnp.sqrt(hidden_size)
    u = lambda k, shape: jax.random.uniform(k, shape, jnp.float32, -bound, bound)
    w_ih = u(k1, (input_size, 4 * hidden_size))   # = W_ih^T, gate order [i|f|g|o]
    w_hh = u(k2, (hidden_size, 4 * hidden_size))  # = W_hh^T
    b_ih = u(k3, (1, 4 * hidden_size))
    b_hh = u(k4, (1, 4 * hidden_size))
    b = b_ih + b_hh
    w_fc = u(k5, (hidden_size, 1))                # = W_fc^T
    b_fc = u(k6, (1, 1))
    return (w_ih, w_hh, b, w_fc, b_fc)


def lstm_model_ref(x, params):
    """Pure-JAX reference (lax.scan, f32) for correctness checking."""
    w_ih, w_hh, b, w_fc, b_fc = params
    B = x.shape[0]
    H = w_hh.shape[0]

    def step(carry, x_t):
        h, c = carry
        gates = x_t @ w_ih + h @ w_hh + b
        i = jax.nn.sigmoid(gates[:, 0 * H:1 * H])
        f = jax.nn.sigmoid(gates[:, 1 * H:2 * H])
        g = jnp.tanh(gates[:, 2 * H:3 * H])
        o = jax.nn.sigmoid(gates[:, 3 * H:4 * H])
        c_new = f * c + i * g
        h_new = o * jnp.tanh(c_new)
        return (h_new, c_new), None

    h0 = jnp.zeros((B, H), jnp.float32)
    c0 = jnp.zeros((B, H), jnp.float32)
    (h_last, _), _ = jax.lax.scan(step, (h0, c0), jnp.transpose(x, (1, 0, 2)))
    return (h_last @ w_fc + b_fc)[:, 0]


if __name__ == "__main__":
    batch, seq_len, input_size, hidden_size = 2, 8, 4, 32

    key = jax.random.PRNGKey(0)
    kx, kp = jax.random.split(key)
    x = jax.random.normal(kx, (batch, seq_len, input_size), dtype=jnp.float32)
    params = init_params(kp, input_size, hidden_size)

    ref = lstm_model_ref(x, params)

    # f32 matmul path: tight check against the lax.scan reference (sigmoid is
    # computed via tanh in-kernel, so allow a hair more than exact-f32 slop).
    fwd_f32 = jax.jit(functools.partial(lstm_model_forward, compute_dtype=jnp.float32))
    out_f32 = jax.block_until_ready(fwd_f32(x, params))
    assert out_f32.shape == (batch,)
    assert jnp.allclose(out_f32, ref, atol=5e-5, rtol=5e-5), (out_f32, ref)

    # bf16-matmul path (default perf configuration for v6e/v7x): looser tolerance.
    fwd_bf16 = jax.jit(functools.partial(lstm_model_forward, compute_dtype=jnp.bfloat16))
    out_bf16 = jax.block_until_ready(fwd_bf16(x, params))
    assert out_bf16.shape == (batch,)
    assert jnp.allclose(out_bf16, ref, atol=5e-2, rtol=5e-2), (out_bf16, ref)

    print("KERNEL_OK")
</pallas_src>

<mosaic_0001>
module attributes {stable_mosaic.version = 11 : i64} {
  func.func @_lstm_kernel(%arg0: i32, %arg1: memref<8x8x4xf32, #tpu.memory_space<vmem>>, %arg2: memref<4x512xf32, #tpu.memory_space<vmem>>, %arg3: memref<128x512xf32, #tpu.memory_space<vmem>>, %arg4: memref<1x512xf32, #tpu.memory_space<vmem>>, %arg5: memref<8x128xf32, #tpu.memory_space<vmem>>, %arg6: memref<8x8x512xf32, #tpu.memory_space<vmem>>, %arg7: memref<8x128xf32, #tpu.memory_space<vmem>>, %arg8: memref<8x128xf32, #tpu.memory_space<vmem>>) attributes {dimension_semantics = [#tpu.dimension_semantics<arbitrary>], iteration_bounds = array<i64: 1>, scalar_prefetch = 0 : i64, scratch_operands = 3 : i64, tpu.core_type = #tpu.core_type<tc>, window_params = [{transform_indices = @transform_0, window_bounds = array<i64: 8, 8, 4>}, {pipeline_mode = #tpu.pipeline_mode<synchronous>, transform_indices = @transform_1, window_bounds = array<i64: 4, 512>}, {pipeline_mode = #tpu.pipeline_mode<synchronous>, transform_indices = @transform_2, window_bounds = array<i64: 128, 512>}, {pipeline_mode = #tpu.pipeline_mode<synchronous>, transform_indices = @transform_3, window_bounds = array<i64: 1, 512>}, {pipeline_mode = #tpu.pipeline_mode<synchronous>, transform_indices = @transform_4, window_bounds = array<i64: 8, 128>}]} {
    %c0_i32 = arith.constant 0 : i32
    %0 = arith.cmpi eq, %arg0, %c0_i32 : i32
    %1 = arith.extui %0 : i1 to i32
    %c0_i32_0 = arith.constant 0 : i32
    %2 = arith.cmpi ne, %1, %c0_i32_0 : i32
    scf.if %2 {
      %cst_119 = arith.constant 0.000000e+00 : f32
      %308 = vector.broadcast %cst_119 : f32 to vector<8x128xf32>
      %c0_120 = arith.constant 0 : index
      %c0_121 = arith.constant 0 : index
      %309 = vector.load %arg7[%c0_120, %c0_121] : memref<8x128xf32, #tpu.memory_space<vmem>>, vector<8x128xf32>
      tpu.vector_store %arg7[%c0_120, %c0_121], %308 {strides = array<i32>} : memref<8x128xf32, #tpu.memory_space<vmem>>, vector<8x128xf32>,
      %cst_122 = arith.constant 0.000000e+00 : f32
      %310 = vector.broadcast %cst_122 : f32 to vector<8x128xf32>
      %c0_123 = arith.constant 0 : index
      %c0_124 = arith.constant 0 : index
      %311 = vector.load %arg8[%c0_123, %c0_124] : memref<8x128xf32, #tpu.memory_space<vmem>>, vector<8x128xf32>
      tpu.vector_store %arg8[%c0_123, %c0_124], %310 {strides = array<i32>} : memref<8x128xf32, #tpu.memory_space<vmem>>, vector<8x128xf32>,
    } else {
    }
    %c0 = arith.constant 0 : index
    %c0_1 = arith.constant 0 : index
    %c0_2 = arith.constant 0 : index
    %3 = vector.load %arg1[%c0, %c0_1, %c0_2] : memref<8x8x4xf32, #tpu.memory_space<vmem>>, vector<8x8x4xf32>
    %4 = vector.shape_cast %3 : vector<8x8x4xf32> to vector<64x4xf32>
    %c0_3 = arith.constant 0 : index
    %c0_4 = arith.constant 0 : index
    %5 = vector.load %arg2[%c0_3, %c0_4] : memref<4x512xf32, #tpu.memory_space<vmem>>, vector<4x512xf32>
    %cst = arith.constant dense<0.000000e+00> : vector<64x512xf32>
    %6 = tpu.matmul %4, %5, %cst {dimension_numbers = #tpu.dot_dimension_numbers<[1], [0], [0], [1], [0, 0, 1, 1], [], []>} : vector<64x4xf32>, vector<4x512xf32>, vector<64x512xf32> -> vector<64x512xf32>
    %c0_5 = arith.constant 0 : index
    %c0_6 = arith.constant 0 : index
    %7 = vector.load %arg4[%c0_5, %c0_6] : memref<1x512xf32, #tpu.memory_space<vmem>>, vector<1x512xf32>
    %8 = vector.broadcast %7 : vector<1x512xf32> to vector<64x512xf32>
    %9 = arith.addf %6, %8 : vector<64x512xf32>
    %10 = vector.shape_cast %9 : vector<64x512xf32> to vector<8x8x512xf32>
    %c0_7 = arith.constant 0 : index
    %c0_8 = arith.constant 0 : index
    %c0_9 = arith.constant 0 : index
    %11 = vector.load %arg6[%c0_7, %c0_8, %c0_9] : memref<8x8x512xf32, #tpu.memory_space<vmem>>, vector<8x8x512xf32>
    tpu.vector_store %arg6[%c0_7, %c0_8, %c0_9], %10 {strides = array<i32>} : memref<8x8x512xf32, #tpu.memory_space<vmem>>, vector<8x8x512xf32>,
    %c0_10 = arith.constant 0 : index
    %c0_11 = arith.constant 0 : index
    %12 = vector.load %arg3[%c0_10, %c0_11] : memref<128x512xf32, #tpu.memory_space<vmem>>, vector<128x512xf32>
    %c0_12 = arith.constant 0 : index
    %c0_13 = arith.constant 0 : index
    %13 = vector.load %arg7[%c0_12, %c0_13] : memref<8x128xf32, #tpu.memory_space<vmem>>, vector<8x128xf32>
    %c0_14 = arith.constant 0 : index
    %c0_15 = arith.constant 0 : index
    %14 = vector.load %arg8[%c0_14, %c0_15] : memref<8x128xf32, #tpu.memory_space<vmem>>, vector<8x128xf32>
    %c0_i32_16 = arith.constant 0 : i32
    %15 = arith.index_cast %c0_i32_16 : i32 to index
    %c0_17 = arith.constant 0 : index
    %c0_18 = arith.constant 0 : index
    %16 = vector.load %arg6[%15, %c0_17, %c0_18] : memref<8x8x512xf32, #tpu.memory_space<vmem>>, vector<1x8x512xf32>
    %17 = vector.shape_cast %16 : vector<1x8x512xf32> to vector<8x512xf32>
    %cst_19 = arith.constant dense<0.000000e+00> : vector<8x512xf32>
    %18 = tpu.matmul %13, %12, %cst_19 {dimension_numbers = #tpu.dot_dimension_numbers<[1], [0], [0], [1], [0, 0, 1, 1], [], []>} : vector<8x128xf32>, vector<128x512xf32>, vector<8x512xf32> -> vector<8x512xf32>
    %19 = arith.addf %17, %18 : vector<8x512xf32>
    %20 = vector.extract_strided_slice %19 {offsets = [0, 0], sizes = [8, 128], strides = [1, 1]} : vector<8x512xf32> to vector<8x128xf32>
    %cst_20 = arith.constant 5.000000e-01 : f32
    %21 = vector.broadcast %cst_20 : f32 to vector<8x128xf32>
    %22 = arith.mulf %21, %20 : vector<8x128xf32>
    %23 = math.tanh %22 : vector<8x128xf32>
    %cst_21 = arith.constant 5.000000e-01 : f32
    %24 = vector.broadcast %cst_21 : f32 to vector<8x128xf32>
    %25 = arith.mulf %24, %23 : vector<8x128xf32>
    %cst_22 = arith.constant 5.000000e-01 : f32
    %26 = vector.broadcast %cst_22 : f32 to vector<8x128xf32>
    %27 = arith.addf %25, %26 : vector<8x128xf32>
    %28 = vector.extract_strided_slice %19 {offsets = [0, 128], sizes = [8, 128], strides = [1, 1]} : vector<8x512xf32> to vector<8x128xf32>
    %cst_23 = arith.constant 5.000000e-01 : f32
    %29 = vector.broadcast %cst_23 : f32 to vector<8x128xf32>
    %30 = arith.mulf %29, %28 : vector<8x128xf32>
    %31 = math.tanh %30 : vector<8x128xf32>
    %cst_24 = arith.constant 5.000000e-01 : f32
    %32 = vector.broadcast %cst_24 : f32 to vector<8x128xf32>
    %33 = arith.mulf %32, %31 : vector<8x128xf32>
    %cst_25 = arith.constant 5.000000e-01 : f32
    %34 = vector.broadcast %cst_25 : f32 to vector<8x128xf32>
    %35 = arith.addf %33, %34 : vector<8x128xf32>
    %36 = vector.extract_strided_slice %19 {offsets = [0, 256], sizes = [8, 128], strides = [1, 1]} : vector<8x512xf32> to vector<8x128xf32>
    %37 = math.tanh %36 : vector<8x128xf32>
    %38 = vector.extract_strided_slice %19 {offsets = [0, 384], sizes = [8, 128], strides = [1, 1]} : vector<8x512xf32> to vector<8x128xf32>
    %cst_26 = arith.constant 5.000000e-01 : f32
    %39 = vector.broadcast %cst_26 : f32 to vector<8x128xf32>
    %40 = arith.mulf %39, %38 : vector<8x128xf32>
    %41 = math.tanh %40 : vector<8x128xf32>
    %cst_27 = arith.constant 5.000000e-01 : f32
    %42 = vector.broadcast %cst_27 : f32 to vector<8x128xf32>
    %43 = arith.mulf %42, %41 : vector<8x128xf32>
    %cst_28 = arith.constant 5.000000e-01 : f32
    %44 = vector.broadcast %cst_28 : f32 to vector<8x128xf32>
    %45 = arith.addf %43, %44 : vector<8x128xf32>
    %46 = arith.mulf %35, %14 : vector<8x128xf32>
    %47 = arith.mulf %27, %37 : vector<8x128xf32>
    %48 = arith.addf %46, %47 : vector<8x128xf32>
    %49 = math.tanh %48 : vector<8x128xf32>
    %50 = arith.mulf %45, %49 : vector<8x128xf32>
    %c1_i32 = arith.constant 1 : i32
    %51 = arith.index_cast %c1_i32 : i32 to index
    %c0_29 = arith.constant 0 : index
    %c0_30 = arith.constant 0 : index
    %52 = vector.load %arg6[%51, %c0_29, %c0_30] : memref<8x8x512xf32, #tpu.memory_space<vmem>>, vector<1x8x512xf32>
    %53 = vector.shape_cast %52 : vector<1x8x512xf32> to vector<8x512xf32>
    %cst_31 = arith.constant dense<0.000000e+00> : vector<8x512xf32>
    %54 = tpu.matmul %50, %12, %cst_31 {dimension_numbers = #tpu.dot_dimension_numbers<[1], [0], [0], [1], [0, 0, 1, 1], [], []>} : vector<8x128xf32>, vector<128x512xf32>, vector<8x512xf32> -> vector<8x512xf32>
    %55 = arith.addf %53, %54 : vector<8x512xf32>
    %56 = vector.extract_strided_slice %55 {offsets = [0, 0], sizes = [8, 128], strides = [1, 1]} : vector<8x512xf32> to vector<8x128xf32>
    %cst_32 = arith.constant 5.000000e-01 : f32
    %57 = vector.broadcast %cst_32 : f32 to vector<8x128xf32>
    %58 = arith.mulf %57, %56 : vector<8x128xf32>
    %59 = math.tanh %58 : vector<8x128xf32>
    %cst_33 = arith.constant 5.000000e-01 : f32
    %60 = vector.broadcast %cst_33 : f32 to vector<8x128xf32>
    %61 = arith.mulf %60, %59 : vector<8x128xf32>
    %cst_34 = arith.constant 5.000000e-01 : f32
    %62 = vector.broadcast %cst_34 : f32 to vector<8x128xf32>
    %63 = arith.addf %61, %62 : vector<8x128xf32>
    %64 = vector.extract_strided_slice %55 {offsets = [0, 128], sizes = [8, 128], strides = [1, 1]} : vector<8x512xf32> to vector<8x128xf32>
    %cst_35 = arith.constant 5.000000e-01 : f32
    %65 = vector.broadcast %cst_35 : f32 to vector<8x128xf32>
    %66 = arith.mulf %65, %64 : vector<8x128xf32>
    %67 = math.tanh %66 : vector<8x128xf32>
    %cst_36 = arith.constant 5.000000e-01 : f32
    %68 = vector.broadcast %cst_36 : f32 to vector<8x128xf32>
    %69 = arith.mulf %68, %67 : vector<8x128xf32>
    %cst_37 = arith.constant 5.000000e-01 : f32
    %70 = vector.broadcast %cst_37 : f32 to vector<8x128xf32>
    %71 = arith.addf %69, %70 : vector<8x128xf32>
    %72 = vector.extract_strided_slice %55 {offsets = [0, 256], sizes = [8, 128], strides = [1, 1]} : vector<8x512xf32> to vector<8x128xf32>
    %73 = math.tanh %72 : vector<8x128xf32>
    %74 = vector.extract_strided_slice %55 {offsets = [0, 384], sizes = [8, 128], strides = [1, 1]} : vector<8x512xf32> to vector<8x128xf32>
    %cst_38 = arith.constant 5.000000e-01 : f32
    %75 = vector.broadcast %cst_38 : f32 to vector<8x128xf32>
    %76 = arith.mulf %75, %74 : vector<8x128xf32>
    %77 = math.tanh %76 : vector<8x128xf32>
    %cst_39 = arith.constant 5.000000e-01 : f32
    %78 = vector.broadcast %cst_39 : f32 to vector<8x128xf32>
    %79 = arith.mulf %78, %77 : vector<8x128xf32>
    %cst_40 = arith.constant 5.000000e-01 : f32
    %80 = vector.broadcast %cst_40 : f32 to vector<8x128xf32>
    %81 = arith.addf %79, %80 : vector<8x128xf32>
    %82 = arith.mulf %71, %48 : vector<8x128xf32>
    %83 = arith.mulf %63, %73 : vector<8x128xf32>
    %84 = arith.addf %82, %83 : vector<8x128xf32>
    %85 = math.tanh %84 : vector<8x128xf32>
    %86 = arith.mulf %81, %85 : vector<8x128xf32>
    %c2_i32 = arith.constant 2 : i32
    %87 = arith.index_cast %c2_i32 : i32 to index
    %c0_41 = arith.constant 0 : index
    %c0_42 = arith.constant 0 : index
    %88 = vector.load %arg6[%87, %c0_41, %c0_42] : memref<8x8x512xf32, #tpu.memory_space<vmem>>, vector<1x8x512xf32>
    %89 = vector.shape_cast %88 : vector<1x8x512xf32> to vector<8x512xf32>
    %cst_43 = arith.constant dense<0.000000e+00> : vector<8x512xf32>
    %90 = tpu.matmul %86, %12, %cst_43 {dimension_numbers = #tpu.dot_dimension_numbers<[1], [0], [0], [1], [0, 0, 1, 1], [], []>} : vector<8x128xf32>, vector<128x512xf32>, vector<8x512xf32> -> vector<8x512xf32>
    %91 = arith.addf %89, %90 : vector<8x512xf32>
    %92 = vector.extract_strided_slice %91 {offsets = [0, 0], sizes = [8, 128], strides = [1, 1]} : vector<8x512xf32> to vector<8x128xf32>
    %cst_44 = arith.constant 5.000000e-01 : f32
    %93 = vector.broadcast %cst_44 : f32 to vector<8x128xf32>
    %94 = arith.mulf %93, %92 : vector<8x128xf32>
    %95 = math.tanh %94 : vector<8x128xf32>
    %cst_45 = arith.constant 5.000000e-01 : f32
    %96 = vector.broadcast %cst_45 : f32 to vector<8x128xf32>
    %97 = arith.mulf %96, %95 : vector<8x128xf32>
    %cst_46 = arith.constant 5.000000e-01 : f32
    %98 = vector.broadcast %cst_46 : f32 to vector<8x128xf32>
    %99 = arith.addf %97, %98 : vector<8x128xf32>
    %100 = vector.extract_strided_slice %91 {offsets = [0, 128], sizes = [8, 128], strides = [1, 1]} : vector<8x512xf32> to vector<8x128xf32>
    %cst_47 = arith.constant 5.000000e-01 : f32
    %101 = vector.broadcast %cst_47 : f32 to vector<8x128xf32>
    %102 = arith.mulf %101, %100 : vector<8x128xf32>
    %103 = math.tanh %102 : vector<8x128xf32>
    %cst_48 = arith.constant 5.000000e-01 : f32
    %104 = vector.broadcast %cst_48 : f32 to vector<8x128xf32>
    %105 = arith.mulf %104, %103 : vector<8x128xf32>
    %cst_49 = arith.constant 5.000000e-01 : f32
    %106 = vector.broadcast %cst_49 : f32 to vector<8x128xf32>
    %107 = arith.addf %105, %106 : vector<8x128xf32>
    %108 = vector.extract_strided_slice %91 {offsets = [0, 256], sizes = [8, 128], strides = [1, 1]} : vector<8x512xf32> to vector<8x128xf32>
    %109 = math.tanh %108 : vector<8x128xf32>
    %110 = vector.extract_strided_slice %91 {offsets = [0, 384], sizes = [8, 128], strides = [1, 1]} : vector<8x512xf32> to vector<8x128xf32>
    %cst_50 = arith.constant 5.000000e-01 : f32
    %111 = vector.broadcast %cst_50 : f32 to vector<8x128xf32>
    %112 = arith.mulf %111, %110 : vector<8x128xf32>
    %113 = math.tanh %112 : vector<8x128xf32>
    %cst_51 = arith.constant 5.000000e-01 : f32
    %114 = vector.broadcast %cst_51 : f32 to vector<8x128xf32>
    %115 = arith.mulf %114, %113 : vector<8x128xf32>
    %cst_52 = arith.constant 5.000000e-01 : f32
    %116 = vector.broadcast %cst_52 : f32 to vector<8x128xf32>
    %117 = arith.addf %115, %116 : vector<8x128xf32>
    %118 = arith.mulf %107, %84 : vector<8x128xf32>
    %119 = arith.mulf %99, %109 : vector<8x128xf32>
    %120 = arith.addf %118, %119 : vector<8x128xf32>
    %121 = math.tanh %120 : vector<8x128xf32>
    %122 = arith.mulf %117, %121 : vector<8x128xf32>
    %c3_i32 = arith.constant 3 : i32
    %123 = arith.index_cast %c3_i32 : i32 to index
    %c0_53 = arith.constant 0 : index
    %c0_54 = arith.constant 0 : index
    %124 = vector.load %arg6[%123, %c0_53, %c0_54] : memref<8x8x512xf32, #tpu.memory_space<vmem>>, vector<1x8x512xf32>
    %125 = vector.shape_cast %124 : vector<1x8x512xf32> to vector<8x512xf32>
    %cst_55 = arith.constant dense<0.000000e+00> : vector<8x512xf32>
    %126 = tpu.matmul %122, %12, %cst_55 {dimension_numbers = #tpu.dot_dimension_numbers<[1], [0], [0], [1], [0, 0, 1, 1], [], []>} : vector<8x128xf32>, vector<128x512xf32>, vector<8x512xf32> -> vector<8x512xf32>
    %127 = arith.addf %125, %126 : vector<8x512xf32>
    %128 = vector.extract_strided_slice %127 {offsets = [0, 0], sizes = [8, 128], strides = [1, 1]} : vector<8x512xf32> to vector<8x128xf32>
    %cst_56 = arith.constant 5.000000e-01 : f32
    %129 = vector.broadcast %cst_56 : f32 to vector<8x128xf32>
    %130 = arith.mulf %129, %128 : vector<8x128xf32>
    %131 = math.tanh %130 : vector<8x128xf32>
    %cst_57 = arith.constant 5.000000e-01 : f32
    %132 = vector.broadcast %cst_57 : f32 to vector<8x128xf32>
    %133 = arith.mulf %132, %131 : vector<8x128xf32>
    %cst_58 = arith.constant 5.000000e-01 : f32
    %134 = vector.broadcast %cst_58 : f32 to vector<8x128xf32>
    %135 = arith.addf %133, %134 : vector<8x128xf32>
    %136 = vector.extract_strided_slice %127 {offsets = [0, 128], sizes = [8, 128], strides = [1, 1]} : vector<8x512xf32> to vector<8x128xf32>
    %cst_59 = arith.constant 5.000000e-01 : f32
    %137 = vector.broadcast %cst_59 : f32 to vector<8x128xf32>
    %138 = arith.mulf %137, %136 : vector<8x128xf32>
    %139 = math.tanh %138 : vector<8x128xf32>
    %cst_60 = arith.constant 5.000000e-01 : f32
    %140 = vector.broadcast %cst_60 : f32 to vector<8x128xf32>
    %141 = arith.mulf %140, %139 : vector<8x128xf32>
    %cst_61 = arith.constant 5.000000e-01 : f32
    %142 = vector.broadcast %cst_61 : f32 to vector<8x128xf32>
    %143 = arith.addf %141, %142 : vector<8x128xf32>
    %144 = vector.extract_strided_slice %127 {offsets = [0, 256], sizes = [8, 128], strides = [1, 1]} : vector<8x512xf32> to vector<8x128xf32>
    %145 = math.tanh %144 : vector<8x128xf32>
    %146 = vector.extract_strided_slice %127 {offsets = [0, 384], sizes = [8, 128], strides = [1, 1]} : vector<8x512xf32> to vector<8x128xf32>
    %cst_62 = arith.constant 5.000000e-01 : f32
    %147 = vector.broadcast %cst_62 : f32 to vector<8x128xf32>
    %148 = arith.mulf %147, %146 : vector<8x128xf32>
    %149 = math.tanh %148 : vector<8x128xf32>
    %cst_63 = arith.constant 5.000000e-01 : f32
    %150 = vector.broadcast %cst_63 : f32 to vector<8x128xf32>
    %151 = arith.mulf %150, %149 : vector<8x128xf32>
    %cst_64 = arith.constant 5.000000e-01 : f32
    %152 = vector.broadcast %cst_64 : f32 to vector<8x128xf32>
    %153 = arith.addf %151, %152 : vector<8x128xf32>
    %154 = arith.mulf %143, %120 : vector<8x128xf32>
    %155 = arith.mulf %135, %145 : vector<8x128xf32>
    %156 = arith.addf %154, %155 : vector<8x128xf32>
    %157 = math.tanh %156 : vector<8x128xf32>
    %158 = arith.mulf %153, %157 : vector<8x128xf32>
    %c4_i32 = arith.constant 4 : i32
    %159 = arith.index_cast %c4_i32 : i32 to index
    %c0_65 = arith.constant 0 : index
    %c0_66 = arith.constant 0 : index
    %160 = vector.load %arg6[%159, %c0_65, %c0_66] : memref<8x8x512xf32, #tpu.memory_space<vmem>>, vector<1x8x512xf32>
    %161 = vector.shape_cast %160 : vector<1x8x512xf32> to vector<8x512xf32>
    %cst_67 = arith.constant dense<0.000000e+00> : vector<8x512xf32>
    %162 = tpu.matmul %158, %12, %cst_67 {dimension_numbers = #tpu.dot_dimension_numbers<[1], [0], [0], [1], [0, 0, 1, 1], [], []>} : vector<8x128xf32>, vector<128x512xf32>, vector<8x512xf32> -> vector<8x512xf32>
    %163 = arith.addf %161, %162 : vector<8x512xf32>
    %164 = vector.extract_strided_slice %163 {offsets = [0, 0], sizes = [8, 128], strides = [1, 1]} : vector<8x512xf32> to vector<8x128xf32>
    %cst_68 = arith.constant 5.000000e-01 : f32
    %165 = vector.broadcast %cst_68 : f32 to vector<8x128xf32>
    %166 = arith.mulf %165, %164 : vector<8x128xf32>
    %167 = math.tanh %166 : vector<8x128xf32>
    %cst_69 = arith.constant 5.000000e-01 : f32
    %168 = vector.broadcast %cst_69 : f32 to vector<8x128xf32>
    %169 = arith.mulf %168, %167 : vector<8x128xf32>
    %cst_70 = arith.constant 5.000000e-01 : f32
    %170 = vector.broadcast %cst_70 : f32 to vector<8x128xf32>
    %171 = arith.addf %169, %170 : vector<8x128xf32>
    %172 = vector.extract_strided_slice %163 {offsets = [0, 128], sizes = [8, 128], strides = [1, 1]} : vector<8x512xf32> to vector<8x128xf32>
    %cst_71 = arith.constant 5.000000e-01 : f32
    %173 = vector.broadcast %cst_71 : f32 to vector<8x128xf32>
    %174 = arith.mulf %173, %172 : vector<8x128xf32>
    %175 = math.tanh %174 : vector<8x128xf32>
    %cst_72 = arith.constant 5.000000e-01 : f32
    %176 = vector.broadcast %cst_72 : f32 to vector<8x128xf32>
    %177 = arith.mulf %176, %175 : vector<8x128xf32>
    %cst_73 = arith.constant 5.000000e-01 : f32
    %178 = vector.broadcast %cst_73 : f32 to vector<8x128xf32>
    %179 = arith.addf %177, %178 : vector<8x128xf32>
    %180 = vector.extract_strided_slice %163 {offsets = [0, 256], sizes = [8, 128], strides = [1, 1]} : vector<8x512xf32> to vector<8x128xf32>
    %181 = math.tanh %180 : vector<8x128xf32>
    %182 = vector.extract_strided_slice %163 {offsets = [0, 384], sizes = [8, 128], strides = [1, 1]} : vector<8x512xf32> to vector<8x128xf32>
    %cst_74 = arith.constant 5.000000e-01 : f32
    %183 = vector.broadcast %cst_74 : f32 to vector<8x128xf32>
    %184 = arith.mulf %183, %182 : vector<8x128xf32>
    %185 = math.tanh %184 : vector<8x128xf32>
    %cst_75 = arith.constant 5.000000e-01 : f32
    %186 = vector.broadcast %cst_75 : f32 to vector<8x128xf32>
    %187 = arith.mulf %186, %185 : vector<8x128xf32>
    %cst_76 = arith.constant 5.000000e-01 : f32
    %188 = vector.broadcast %cst_76 : f32 to vector<8x128xf32>
    %189 = arith.addf %187, %188 : vector<8x128xf32>
    %190 = arith.mulf %179, %156 : vector<8x128xf32>
    %191 = arith.mulf %171, %181 : vector<8x128xf32>
    %192 = arith.addf %190, %191 : vector<8x128xf32>
    %193 = math.tanh %192 : vector<8x128xf32>
    %194 = arith.mulf %189, %193 : vector<8x128xf32>
    %c5_i32 = arith.constant 5 : i32
    %195 = arith.index_cast %c5_i32 : i32 to index
    %c0_77 = arith.constant 0 : index
    %c0_78 = arith.constant 0 : index
    %196 = vector.load %arg6[%195, %c0_77, %c0_78] : memref<8x8x512xf32, #tpu.memory_space<vmem>>, vector<1x8x512xf32>
    %197 = vector.shape_cast %196 : vector<1x8x512xf32> to vector<8x512xf32>
    %cst_79 = arith.constant dense<0.000000e+00> : vector<8x512xf32>
    %198 = tpu.matmul %194, %12, %cst_79 {dimension_numbers = #tpu.dot_dimension_numbers<[1], [0], [0], [1], [0, 0, 1, 1], [], []>} : vector<8x128xf32>, vector<128x512xf32>, vector<8x512xf32> -> vector<8x512xf32>
    %199 = arith.addf %197, %198 : vector<8x512xf32>
    %200 = vector.extract_strided_slice %199 {offsets = [0, 0], sizes = [8, 128], strides = [1, 1]} : vector<8x512xf32> to vector<8x128xf32>
    %cst_80 = arith.constant 5.000000e-01 : f32
    %201 = vector.broadcast %cst_80 : f32 to vector<8x128xf32>
    %202 = arith.mulf %201, %200 : vector<8x128xf32>
    %203 = math.tanh %202 : vector<8x128xf32>
    %cst_81 = arith.constant 5.000000e-01 : f32
    %204 = vector.broadcast %cst_81 : f32 to vector<8x128xf32>
    %205 = arith.mulf %204, %203 : vector<8x128xf32>
    %cst_82 = arith.constant 5.000000e-01 : f32
    %206 = vector.broadcast %cst_82 : f32 to vector<8x128xf32>
    %207 = arith.addf %205, %206 : vector<8x128xf32>
    %208 = vector.extract_strided_slice %199 {offsets = [0, 128], sizes = [8, 128], strides = [1, 1]} : vector<8x512xf32> to vector<8x128xf32>
    %cst_83 = arith.constant 5.000000e-01 : f32
    %209 = vector.broadcast %cst_83 : f32 to vector<8x128xf32>
    %210 = arith.mulf %209, %208 : vector<8x128xf32>
    %211 = math.tanh %210 : vector<8x128xf32>
    %cst_84 = arith.constant 5.000000e-01 : f32
    %212 = vector.broadcast %cst_84 : f32 to vector<8x128xf32>
    %213 = arith.mulf %212, %211 : vector<8x128xf32>
    %cst_85 = arith.constant 5.000000e-01 : f32
    %214 = vector.broadcast %cst_85 : f32 to vector<8x128xf32>
    %215 = arith.addf %213, %214 : vector<8x128xf32>
    %216 = vector.extract_strided_slice %199 {offsets = [0, 256], sizes = [8, 128], strides = [1, 1]} : vector<8x512xf32> to vector<8x128xf32>
    %217 = math.tanh %216 : vector<8x128xf32>
    %218 = vector.extract_strided_slice %199 {offsets = [0, 384], sizes = [8, 128], strides = [1, 1]} : vector<8x512xf32> to vector<8x128xf32>
    %cst_86 = arith.constant 5.000000e-01 : f32
    %219 = vector.broadcast %cst_86 : f32 to vector<8x128xf32>
    %220 = arith.mulf %219, %218 : vector<8x128xf32>
    %221 = math.tanh %220 : vector<8x128xf32>
    %cst_87 = arith.constant 5.000000e-01 : f32
    %222 = vector.broadcast %cst_87 : f32 to vector<8x128xf32>
    %223 = arith.mulf %222, %221 : vector<8x128xf32>
    %cst_88 = arith.constant 5.000000e-01 : f32
    %224 = vector.broadcast %cst_88 : f32 to vector<8x128xf32>
    %225 = arith.addf %223, %224 : vector<8x128xf32>
    %226 = arith.mulf %215, %192 : vector<8x128xf32>
    %227 = arith.mulf %207, %217 : vector<8x128xf32>
    %228 = arith.addf %226, %227 : vector<8x128xf32>
    %229 = math.tanh %228 : vector<8x128xf32>
    %230 = arith.mulf %225, %229 : vector<8x128xf32>
    %c6_i32 = arith.constant 6 : i32
    %231 = arith.index_cast %c6_i32 : i32 to index
    %c0_89 = arith.constant 0 : index
    %c0_90 = arith.constant 0 : index
    %232 = vector.load %arg6[%231, %c0_89, %c0_90] : memref<8x8x512xf32, #tpu.memory_space<vmem>>, vector<1x8x512xf32>
    %233 = vector.shape_cast %232 : vector<1x8x512xf32> to vector<8x512xf32>
    %cst_91 = arith.constant dense<0.000000e+00> : vector<8x512xf32>
    %234 = tpu.matmul %230, %12, %cst_91 {dimension_numbers = #tpu.dot_dimension_numbers<[1], [0], [0], [1], [0, 0, 1, 1], [], []>} : vector<8x128xf32>, vector<128x512xf32>, vector<8x512xf32> -> vector<8x512xf32>
    %235 = arith.addf %233, %234 : vector<8x512xf32>
    %236 = vector.extract_strided_slice %235 {offsets = [0, 0], sizes = [8, 128], strides = [1, 1]} : vector<8x512xf32> to vector<8x128xf32>
    %cst_92 = arith.constant 5.000000e-01 : f32
    %237 = vector.broadcast %cst_92 : f32 to vector<8x128xf32>
    %238 = arith.mulf %237, %236 : vector<8x128xf32>
    %239 = math.tanh %238 : vector<8x128xf32>
    %cst_93 = arith.constant 5.000000e-01 : f32
    %240 = vector.broadcast %cst_93 : f32 to vector<8x128xf32>
    %241 = arith.mulf %240, %239 : vector<8x128xf32>
    %cst_94 = arith.constant 5.000000e-01 : f32
    %242 = vector.broadcast %cst_94 : f32 to vector<8x128xf32>
    %243 = arith.addf %241, %242 : vector<8x128xf32>
    %244 = vector.extract_strided_slice %235 {offsets = [0, 128], sizes = [8, 128], strides = [1, 1]} : vector<8x512xf32> to vector<8x128xf32>
    %cst_95 = arith.constant 5.000000e-01 : f32
    %245 = vector.broadcast %cst_95 : f32 to vector<8x128xf32>
    %246 = arith.mulf %245, %244 : vector<8x128xf32>
    %247 = math.tanh %246 : vector<8x128xf32>
    %cst_96 = arith.constant 5.000000e-01 : f32
    %248 = vector.broadcast %cst_96 : f32 to vector<8x128xf32>
    %249 = arith.mulf %248, %247 : vector<8x128xf32>
    %cst_97 = arith.constant 5.000000e-01 : f32
    %250 = vector.broadcast %cst_97 : f32 to vector<8x128xf32>
    %251 = arith.addf %249, %250 : vector<8x128xf32>
    %252 = vector.extract_strided_slice %235 {offsets = [0, 256], sizes = [8, 128], strides = [1, 1]} : vector<8x512xf32> to vector<8x128xf32>
    %253 = math.tanh %252 : vector<8x128xf32>
    %254 = vector.extract_strided_slice %235 {offsets = [0, 384], sizes = [8, 128], strides = [1, 1]} : vector<8x512xf32> to vector<8x128xf32>
    %cst_98 = arith.constant 5.000000e-01 : f32
    %255 = vector.broadcast %cst_98 : f32 to vector<8x128xf32>
    %256 = arith.mulf %255, %254 : vector<8x128xf32>
    %257 = math.tanh %256 : vector<8x128xf32>
    %cst_99 = arith.constant 5.000000e-01 : f32
    %258 = vector.broadcast %cst_99 : f32 to vector<8x128xf32>
    %259 = arith.mulf %258, %257 : vector<8x128xf32>
    %cst_100 = arith.constant 5.000000e-01 : f32
    %260 = vector.broadcast %cst_100 : f32 to vector<8x128xf32>
    %261 = arith.addf %259, %260 : vector<8x128xf32>
    %262 = arith.mulf %251, %228 : vector<8x128xf32>
    %263 = arith.mulf %243, %253 : vector<8x128xf32>
    %264 = arith.addf %262, %263 : vector<8x128xf32>
    %265 = math.tanh %264 : vector<8x128xf32>
    %266 = arith.mulf %261, %265 : vector<8x128xf32>
    %c7_i32 = arith.constant 7 : i32
    %267 = arith.index_cast %c7_i32 : i32 to index
    %c0_101 = arith.constant 0 : index
    %c0_102 = arith.constant 0 : index
    %268 = vector.load %arg6[%267, %c0_101, %c0_102] : memref<8x8x512xf32, #tpu.memory_space<vmem>>, vector<1x8x512xf32>
    %269 = vector.shape_cast %268 : vector<1x8x512xf32> to vector<8x512xf32>
    %cst_103 = arith.constant dense<0.000000e+00> : vector<8x512xf32>
    %270 = tpu.matmul %266, %12, %cst_103 {dimension_numbers = #tpu.dot_dimension_numbers<[1], [0], [0], [1], [0, 0, 1, 1], [], []>} : vector<8x128xf32>, vector<128x512xf32>, vector<8x512xf32> -> vector<8x512xf32>
    %271 = arith.addf %269, %270 : vector<8x512xf32>
    %272 = vector.extract_strided_slice %271 {offsets = [0, 0], sizes = [8, 128], strides = [1, 1]} : vector<8x512xf32> to vector<8x128xf32>
    %cst_104 = arith.constant 5.000000e-01 : f32
    %273 = vector.broadcast %cst_104 : f32 to vector<8x128xf32>
    %274 = arith.mulf %273, %272 : vector<8x128xf32>
    %275 = math.tanh %274 : vector<8x128xf32>
    %cst_105 = arith.constant 5.000000e-01 : f32
    %276 = vector.broadcast %cst_105 : f32 to vector<8x128xf32>
    %277 = arith.mulf %276, %275 : vector<8x128xf32>
    %cst_106 = arith.constant 5.000000e-01 : f32
    %278 = vector.broadcast %cst_106 : f32 to vector<8x128xf32>
    %279 = arith.addf %277, %278 : vector<8x128xf32>
    %280 = vector.extract_strided_slice %271 {offsets = [0, 128], sizes = [8, 128], strides = [1, 1]} : vector<8x512xf32> to vector<8x128xf32>
    %cst_107 = arith.constant 5.000000e-01 : f32
    %281 = vector.broadcast %cst_107 : f32 to vector<8x128xf32>
    %282 = arith.mulf %281, %280 : vector<8x128xf32>
    %283 = math.tanh %282 : vector<8x128xf32>
    %cst_108 = arith.constant 5.000000e-01 : f32
    %284 = vector.broadcast %cst_108 : f32 to vector<8x128xf32>
    %285 = arith.mulf %284, %283 : vector<8x128xf32>
    %cst_109 = arith.constant 5.000000e-01 : f32
    %286 = vector.broadcast %cst_109 : f32 to vector<8x128xf32>
    %287 = arith.addf %285, %286 : vector<8x128xf32>
    %288 = vector.extract_strided_slice %271 {offsets = [0, 256], sizes = [8, 128], strides = [1, 1]} : vector<8x512xf32> to vector<8x128xf32>
    %289 = math.tanh %288 : vector<8x128xf32>
    %290 = vector.extract_strided_slice %271 {offsets = [0, 384], sizes = [8, 128], strides = [1, 1]} : vector<8x512xf32> to vector<8x128xf32>
    %cst_110 = arith.constant 5.000000e-01 : f32
    %291 = vector.broadcast %cst_110 : f32 to vector<8x128xf32>
    %292 = arith.mulf %291, %290 : vector<8x128xf32>
    %293 = math.tanh %292 : vector<8x128xf32>
    %cst_111 = arith.constant 5.000000e-01 : f32
    %294 = vector.broadcast %cst_111 : f32 to vector<8x128xf32>
    %295 = arith.mulf %294, %293 : vector<8x128xf32>
    %cst_112 = arith.constant 5.000000e-01 : f32
    %296 = vector.broadcast %cst_112 : f32 to vector<8x128xf32>
    %297 = arith.addf %295, %296 : vector<8x128xf32>
    %298 = arith.mulf %287, %264 : vector<8x128xf32>
    %299 = arith.mulf %279, %289 : vector<8x128xf32>
    %300 = arith.addf %298, %299 : vector<8x128xf32>
    %301 = math.tanh %300 : vector<8x128xf32>
    %302 = arith.mulf %297, %301 : vector<8x128xf32>
    %c8_i32 = arith.constant 8 : i32
    %c0_113 = arith.constant 0 : index
    %c0_114 = arith.constant 0 : index
    %303 = vector.load %arg7[%c0_113, %c0_114] : memref<8x128xf32, #tpu.memory_space<vmem>>, vector<8x128xf32>
    tpu.vector_store %arg7[%c0_113, %c0_114], %302 {strides = array<i32>} : memref<8x128xf32, #tpu.memory_space<vmem>>, vector<8x128xf32>,
    %c0_115 = arith.constant 0 : index
    %c0_116 = arith.constant 0 : index
    %304 = vector.load %arg8[%c0_115, %c0_116] : memref<8x128xf32, #tpu.memory_space<vmem>>, vector<8x128xf32>
    tpu.vector_store %arg8[%c0_115, %c0_116], %300 {strides = array<i32>} : memref<8x128xf32, #tpu.memory_space<vmem>>, vector<8x128xf32>,
    %c0_i32_117 = arith.constant 0 : i32
    %305 = arith.cmpi eq, %arg0, %c0_i32_117 : i32
    %306 = arith.extui %305 : i1 to i32
    %c0_i32_118 = arith.constant 0 : i32
    %307 = arith.cmpi ne, %306, %c0_i32_118 : i32
    scf.if %307 {
      %c0_119 = arith.constant 0 : index
      %c0_120 = arith.constant 0 : index
      %308 = vector.load %arg7[%c0_119, %c0_120] : memref<8x128xf32, #tpu.memory_space<vmem>>, vector<8x128xf32>
      %c0_121 = arith.constant 0 : index
      %c0_122 = arith.constant 0 : index
      %309 = vector.load %arg5[%c0_121, %c0_122] : memref<8x128xf32, #tpu.memory_space<vmem>>, vector<8x128xf32>
      tpu.vector_store %arg5[%c0_121, %c0_122], %308 {strides = array<i32>} : memref<8x128xf32, #tpu.memory_space<vmem>>, vector<8x128xf32>,
    } else {
    }
    return
  }
  func.func @transform_0(%arg0: i32) -> (i32, i32, i32) {
    %c0_i32 = arith.constant 0 : i32
    %c0_i32_0 = arith.constant 0 : i32
    %c0_i32_1 = arith.constant 0 : i32
    return %arg0, %c0_i32, %c0_i32_0 : i32, i32, i32
  }
  func.func @transform_1(%arg0: i32) -> (i32, i32) {
    %c0_i32 = arith.constant 0 : i32
    %c0_i32_0 = arith.constant 0 : i32
    %c0_i32_1 = arith.constant 0 : i32
    return %c0_i32, %c0_i32_0 : i32, i32
  }
  func.func @transform_2(%arg0: i32) -> (i32, i32) {
    %c0_i32 = arith.constant 0 : i32
    %c0_i32_0 = arith.constant 0 : i32
    %c0_i32_1 = arith.constant 0 : i32
    return %c0_i32, %c0_i32_0 : i32, i32
  }
  func.func @transform_3(%arg0: i32) -> (i32, i32) {
    %c0_i32 = arith.constant 0 : i32
    %c0_i32_0 = arith.constant 0 : i32
    %c0_i32_1 = arith.constant 0 : i32
    return %c0_i32, %c0_i32_0 : i32, i32
  }
  func.func @transform_4(%arg0: i32) -> (i32, i32) {
    %c0_i32 = arith.constant 0 : i32
    %c0_i32_0 = arith.constant 0 : i32
    %c0_i32_1 = arith.constant 0 : i32
    return %c0_i32, %c0_i32_0 : i32, i32
  }
}

</mosaic_0001>

<llo_original>
// kernel: lstm_model_forward.1
$region0: #{lstm_model_forward.1}
  #allocation0 [shape = 'u32[]', space=smem, size = 0x4, offset = 0x4, fixed_abs, tag = 'smem constant byte address 0x4 - core index']
  #allocation1 [shape = 'u32[72,128]{1,0:T(1,128)}', space=vmem, size = 0x9000, scoped, tag = 'internal scratch']
  #allocation2 [shape = 'f32[8,8,512]{2,1,0:T(8,128)}', space=vmem, size = 0x20000, scoped, tag = 'scratch operand']
  #allocation3 [shape = 'f32[8,128]{1,0:T(8,128)}', space=vmem, size = 0x1000, scoped, tag = 'scratch operand']
  #allocation4 [shape = 'f32[8,128]{1,0:T(8,128)}', space=vmem, size = 0x1000, scoped, tag = 'scratch operand']
  %s0 = inlined_call_operand.vmem [shape: f32[8,8,4], index: 0, kind: input, shape index: {}]
  %s1 = inlined_call_operand.vmem [shape: f32[4,512], index: 1, kind: input, shape index: {}]
  %s2 = inlined_call_operand.vmem [shape: f32[128,512], index: 2, kind: input, shape index: {}]
  %s3 = inlined_call_operand.vmem [shape: f32[1,512], index: 3, kind: input, shape index: {}]
  %s4 = inlined_call_operand.vmem [shape: f32[8,128], index: 4, kind: output, shape index: {}]
  %s5 = sld [smem:[#allocation0]]
  $region34: #{lstm_model_forward.1} parent=0
    _
  %s7 = ssub.s32 1, %s5
  %s8 = scalar_select 0, %s7, %s5
  // Predicated region
  $region2: #{lstm_model_forward.1} parent=0 // pred_check
    _
  $region3: #{lstm_model_forward.1} parent=0 // pred_check_branch
    %10 = sbr.rel (0) target = $region5
  $region4: #{lstm_model_forward.1} parent=0 // pred_region
    _
  $region5: #{lstm_model_forward.1} parent=0 // pred_fallthru
    _
  // Predicated region
  $region6: #{lstm_model_forward.1} parent=0 // pred_check
    _
  $region7: #{lstm_model_forward.1} parent=0 // pred_check_branch
    %12 = sbr.rel (0) target = $region9
  $region8: #{lstm_model_forward.1} parent=0 // pred_region
    _
  $region9: #{lstm_model_forward.1} parent=0 // pred_fallthru
    _
  // Predicated region
  $region10: #{lstm_model_forward.1} parent=0 // pred_check
    _
  $region11: #{lstm_model_forward.1} parent=0 // pred_check_branch
    %14 = sbr.rel (0) target = $region13
  $region12: #{lstm_model_forward.1} parent=0 // pred_region
    _
  $region13: #{lstm_model_forward.1} parent=0 // pred_fallthru
    _
  // Predicated region
  $region14: #{lstm_model_forward.1} parent=0 // pred_check
    _
  $region15: #{lstm_model_forward.1} parent=0 // pred_check_branch
    %16 = sbr.rel (0) target = $region17
  $region16: #{lstm_model_forward.1} parent=0 // pred_region
    _
  $region17: #{lstm_model_forward.1} parent=0 // pred_fallthru
    _
  %p17 = scmp.eq.s32.totalorder 0, 0
  // Predicated region
  $region18: #{lstm_model_forward.1} parent=0 // pred_check
    %p18 = pneg %p17
  $region19: #{lstm_model_forward.1} parent=0 // pred_check_branch
    %20 = sbr.rel (%p18) target = $region21
  $region20: #{lstm_model_forward.1} parent=0 // pred_region
    %21 = vst [vmem:[#allocation3] sm:$0xff] 0.0
    %22 = vst [vmem:[#allocation4] sm:$0xff] 0.0
  $region21: #{lstm_model_forward.1} parent=0 // pred_fallthru
    _
  %v23 = vld [vmem:[%s0] sm:$0xff]
  %v24 = vld [vmem:[%s0 + $0x8] sm:$0xff]
  %v25 = vld [vmem:[%s0 + $0x10] sm:$0xff]
  %v26 = vld [vmem:[%s0 + $0x18] sm:$0xff]
  %v27 = vld [vmem:[%s0 + $0x20] sm:$0xff]
  %v28 = vld [vmem:[%s0 + $0x28] sm:$0xff]
  %v29 = vld [vmem:[%s0 + $0x30] sm:$0xff]
  %v30 = vld [vmem:[%s0 + $0x38] sm:$0xff]
  %v31 = vld [vmem:[%s1] sm:$0xff]
  %v32 = vld [vmem:[%s1 + $0x8] sm:$0xff]
  %v33 = vld [vmem:[%s3] sm:$0xf]
  %v35 = vperm.slane %v33, 0
  %v36 = vperm.slane %v33, 1
  %v37 = vperm.slane %v33, 2
  %v38 = vperm.slane %v33, 3
  %45 = vst [vmem:[#allocation1] ss:$2 sm:$0xff] %v31
  %s46 = scalar_lea.vmem [#allocation1], 16
  %47 = vst [vmem:[%s46] ss:$2 sm:$0xff] %v32
  %v48 = vld.sshfl [vmem:[#allocation1] sm:$0xff pattern:$0x75316420]
  %v49 = vld.sshfl [vmem:[#allocation1 + $0x8] sm:$0xff pattern:$0x75316420]
  %v50 = vld.sshfl [vmem:[#allocation1 + $0x10] sm:$0xff pattern:$0x75316420]
  %v51 = vld.sshfl [vmem:[#allocation1 + $0x18] sm:$0xff pattern:$0x75316420]
  %vm52 = vcmask 31744
  %v54 = vsel %vm52, %v23, 0
  %v57 = vsel %vm52, %v24, 0
  %v60 = vsel %vm52, %v25, 0
  %v63 = vsel %vm52, %v26, 0
  %v66 = vsel %vm52, %v27, 0
  %v69 = vsel %vm52, %v28, 0
  %v72 = vsel %vm52, %v29, 0
  %v75 = vsel %vm52, %v30, 0
  %vm77 = vcmask 1043456
  %v78 = vsel %vm77, %v48, 0
  %v80 = vsel %vm77, %v49, 0
  %v82 = vsel %vm77, %v50, 0
  %v84 = vsel %vm77, %v51, 0
  %86 = vmatpush.msra.mxu0 0.0
  %87 = vmatpush.msra.mxu0 0.0
  %88 = vmatpush.msra.mxu0 0.0
  %89 = vmatpush.msra.mxu0 0.0
  %90 = vmatpush.msra.mxu0 0.0
  %91 = vmatpush.msra.mxu0 0.0
  %92 = vmatpush.msra.mxu0 0.0
  %93 = vmatpush.msra.mxu0 0.0
  %94 = vmatpush.msra.mxu0 0.0
  %95 = vmatpush.msra.mxu0 0.0
  %96 = vmatpush.msra.mxu0 0.0
  %97 = vmatpush.msra.mxu0 0.0
  %98 = vmatpush.msra.mxu0 0.0
  %99 = vmatpush.msra.mxu0 0.0
  %100 = vmatpush.msra.mxu0 0.0
  %101 = vmatpush.msra.mxu0 %v78
  %102 = vmatmul.f32.gmra.mxu0 %v54
  %v103 = vpop.f32.mrf.mxu0
  %v104 = vadd.f32 %v35, %v103
  %105 = vmatmul.f32.gmra.mxu0 %v57
  %v106 = vpop.f32.mrf.mxu0
  %v107 = vadd.f32 %v35, %v106
  %108 = vmatmul.f32.gmra.mxu0 %v60
  %v109 = vpop.f32.mrf.mxu0
  %v110 = vadd.f32 %v35, %v109
  %111 = vmatmul.f32.gmra.mxu0 %v63
  %v112 = vpop.f32.mrf.mxu0
  %v113 = vadd.f32 %v35, %v112
  %114 = vmatmul.f32.gmra.mxu0 %v66
  %v115 = vpop.f32.mrf.mxu0
  %v116 = vadd.f32 %v35, %v115
  %117 = vmatmul.f32.gmra.mxu0 %v69
  %v118 = vpop.f32.mrf.mxu0
  %v119 = vadd.f32 %v35, %v118
  %120 = vmatmul.f32.gmra.mxu0 %v72
  %v121 = vpop.f32.mrf.mxu0
  %v122 = vadd.f32 %v35, %v121
  %123 = vmatmul.f32.gmra.mxu0 %v75
  %v124 = vpop.f32.mrf.mxu0
  %v125 = vadd.f32 %v35, %v124
  %126 = vdwg.mxu0
  %127 = vmatpush.msra.mxu0 0.0
  %128 = vmatpush.msra.mxu0 0.0
  %129 = vmatpush.msra.mxu0 0.0
  %130 = vmatpush.msra.mxu0 0.0
  %131 = vmatpush.msra.mxu0 0.0
  %132 = vmatpush.msra.mxu0 0.0
  %133 = vmatpush.msra.mxu0 0.0
  %134 = vmatpush.msra.mxu0 0.0
  %135 = vmatpush.msra.mxu0 0.0
  %136 = vmatpush.msra.mxu0 0.0
  %137 = vmatpush.msra.mxu0 0.0
  %138 = vmatpush.msra.mxu0 0.0
  %139 = vmatpush.msra.mxu0 0.0
  %140 = vmatpush.msra.mxu0 0.0
  %141 = vmatpush.msra.mxu0 0.0
  %142 = vmatpush.msra.mxu0 %v80
  %143 = vmatmul.f32.gmra.mxu0 %v54
  %v144 = vpop.f32.mrf.mxu0
  %v145 = vadd.f32 %v36, %v144
  %146 = vmatmul.f32.gmra.mxu0 %v57
  %v147 = vpop.f32.mrf.mxu0
  %v148 = vadd.f32 %v36, %v147
  %149 = vmatmul.f32.gmra.mxu0 %v60
  %v150 = vpop.f32.mrf.mxu0
  %v151 = vadd.f32 %v36, %v150
  %152 = vmatmul.f32.gmra.mxu0 %v63
  %v153 = vpop.f32.mrf.mxu0
  %v154 = vadd.f32 %v36, %v153
  %155 = vmatmul.f32.gmra.mxu0 %v66
  %v156 = vpop.f32.mrf.mxu0
  %v157 = vadd.f32 %v36, %v156
  %158 = vmatmul.f32.gmra.mxu0 %v69
  %v159 = vpop.f32.mrf.mxu0
  %v160 = vadd.f32 %v36, %v159
  %161 = vmatmul.f32.gmra.mxu0 %v72
  %v162 = vpop.f32.mrf.mxu0
  %v163 = vadd.f32 %v36, %v162
  %164 = vmatmul.f32.gmra.mxu0 %v75
  %v165 = vpop.f32.mrf.mxu0
  %v166 = vadd.f32 %v36, %v165
  %167 = vdwg.mxu0
  %168 = vmatpush.msra.mxu0 0.0
  %169 = vmatpush.msra.mxu0 0.0
  %170 = vmatpush.msra.mxu0 0.0
  %171 = vmatpush.msra.mxu0 0.0
  %172 = vmatpush.msra.mxu0 0.0
  %173 = vmatpush.msra.mxu0 0.0
  %174 = vmatpush.msra.mxu0 0.0
  %175 = vmatpush.msra.mxu0 0.0
  %176 = vmatpush.msra.mxu0 0.0
  %177 = vmatpush.msra.mxu0 0.0
  %178 = vmatpush.msra.mxu0 0.0
  %179 = vmatpush.msra.mxu0 0.0
  %180 = vmatpush.msra.mxu0 0.0
  %181 = vmatpush.msra.mxu0 0.0
  %182 = vmatpush.msra.mxu0 0.0
  %183 = vmatpush.msra.mxu0 %v82
  %184 = vmatmul.f32.gmra.mxu0 %v54
  %v185 = vpop.f32.mrf.mxu0
  %v186 = vadd.f32 %v37, %v185
  %187 = vmatmul.f32.gmra.mxu0 %v57
  %v188 = vpop.f32.mrf.mxu0
  %v189 = vadd.f32 %v37, %v188
  %190 = vmatmul.f32.gmra.mxu0 %v60
  %v191 = vpop.f32.mrf.mxu0
  %v192 = vadd.f32 %v37, %v191
  %193 = vmatmul.f32.gmra.mxu0 %v63
  %v194 = vpop.f32.mrf.mxu0
  %v195 = vadd.f32 %v37, %v194
  %196 = vmatmul.f32.gmra.mxu0 %v66
  %v197 = vpop.f32.mrf.mxu0
  %v198 = vadd.f32 %v37, %v197
  %199 = vmatmul.f32.gmra.mxu0 %v69
  %v200 = vpop.f32.mrf.mxu0
  %v201 = vadd.f32 %v37, %v200
  %202 = vmatmul.f32.gmra.mxu0 %v72
  %v203 = vpop.f32.mrf.mxu0
  %v204 = vadd.f32 %v37, %v203
  %205 = vmatmul.f32.gmra.mxu0 %v75
  %v206 = vpop.f32.mrf.mxu0
  %v207 = vadd.f32 %v37, %v206
  %208 = vdwg.mxu0
  %209 = vmatpush.msra.mxu0 0.0
  %210 = vmatpush.msra.mxu0 0.0
  %211 = vmatpush.msra.mxu0 0.0
  %212 = vmatpush.msra.mxu0 0.0
  %213 = vmatpush.msra.mxu0 0.0
  %214 = vmatpush.msra.mxu0 0.0
  %215 = vmatpush.msra.mxu0 0.0
  %216 = vmatpush.msra.mxu0 0.0
  %217 = vmatpush.msra.mxu0 0.0
  %218 = vmatpush.msra.mxu0 0.0
  %219 = vmatpush.msra.mxu0 0.0
  %220 = vmatpush.msra.mxu0 0.0
  %221 = vmatpush.msra.mxu0 0.0
  %222 = vmatpush.msra.mxu0 0.0
  %223 = vmatpush.msra.mxu0 0.0
  %224 = vmatpush.msra.mxu0 %v84
  %225 = vmatmul.f32.gmra.mxu0 %v54
  %v226 = vpop.f32.mrf.mxu0
  %v227 = vadd.f32 %v38, %v226
  %228 = vmatmul.f32.gmra.mxu0 %v57
  %v229 = vpop.f32.mrf.mxu0
  %v230 = vadd.f32 %v38, %v229
  %231 = vmatmul.f32.gmra.mxu0 %v60
  %v232 = vpop.f32.mrf.mxu0
  %v233 = vadd.f32 %v38, %v232
  %234 = vmatmul.f32.gmra.mxu0 %v63
  %v235 = vpop.f32.mrf.mxu0
  %v236 = vadd.f32 %v38, %v235
  %237 = vmatmul.f32.gmra.mxu0 %v66
  %v238 = vpop.f32.mrf.mxu0
  %v239 = vadd.f32 %v38, %v238
  %240 = vmatmul.f32.gmra.mxu0 %v69
  %v241 = vpop.f32.mrf.mxu0
  %v242 = vadd.f32 %v38, %v241
  %243 = vmatmul.f32.gmra.mxu0 %v72
  %v244 = vpop.f32.mrf.mxu0
  %v245 = vadd.f32 %v38, %v244
  %246 = vmatmul.f32.gmra.mxu0 %v75
  %v247 = vpop.f32.mrf.mxu0
  %v248 = vadd.f32 %v38, %v247
  %249 = vdwg.mxu0
  %250 = vst [vmem:[#allocation2] sm:$0xff] %v104
  %251 = vst [vmem:[#allocation2 + $0x8] sm:$0xff] %v145
  %252 = vst [vmem:[#allocation2 + $0x10] sm:$0xff] %v186
  %253 = vst [vmem:[#allocation2 + $0x18] sm:$0xff] %v227
  %254 = vst [vmem:[#allocation2 + $0x20] sm:$0xff] %v107
  %255 = vst [vmem:[#allocation2 + $0x28] sm:$0xff] %v148
  %256 = vst [vmem:[#allocation2 + $0x30] sm:$0xff] %v189
  %257 = vst [vmem:[#allocation2 + $0x38] sm:$0xff] %v230
  %258 = vst [vmem:[#allocation2 + $0x40] sm:$0xff] %v110
  %259 = vst [vmem:[#allocation2 + $0x48] sm:$0xff] %v151
  %260 = vst [vmem:[#allocation2 + $0x50] sm:$0xff] %v192
  %261 = vst [vmem:[#allocation2 + $0x58] sm:$0xff] %v233
  %262 = vst [vmem:[#allocation2 + $0x60] sm:$0xff] %v113
  %263 = vst [vmem:[#allocation2 + $0x68] sm:$0xff] %v154
  %264 = vst [vmem:[#allocation2 + $0x70] sm:$0xff] %v195
  %265 = vst [vmem:[#allocation2 + $0x78] sm:$0xff] %v236
  %266 = vst [vmem:[#allocation2 + $0x80] sm:$0xff] %v116
  %267 = vst [vmem:[#allocation2 + $0x88] sm:$0xff] %v157
  %268 = vst [vmem:[#allocation2 + $0x90] sm:$0xff] %v198
  %269 = vst [vmem:[#allocation2 + $0x98] sm:$0xff] %v239
  %270 = vst [vmem:[#allocation2 + $0xa0] sm:$0xff] %v119
  %271 = vst [vmem:[#allocation2 + $0xa8] sm:$0xff] %v160
  %272 = vst [vmem:[#allocation2 + $0xb0] sm:$0xff] %v201
  %273 = vst [vmem:[#allocation2 + $0xb8] sm:$0xff] %v242
  %274 = vst [vmem:[#allocation2 + $0xc0] sm:$0xff] %v122
  %275 = vst [vmem:[#allocation2 + $0xc8] sm:$0xff] %v163
  %276 = vst [vmem:[#allocation2 + $0xd0] sm:$0xff] %v204
  %277 = vst [vmem:[#allocation2 + $0xd8] sm:$0xff] %v245
  %278 = vst [vmem:[#allocation2 + $0xe0] sm:$0xff] %v125
  %279 = vst [vmem:[#allocation2 + $0xe8] sm:$0xff] %v166
  %280 = vst [vmem:[#allocation2 + $0xf0] sm:$0xff] %v207
  %281 = vst [vmem:[#allocation2 + $0xf8] sm:$0xff] %v248
  %v282 = vld [vmem:[%s2] sm:$0xff]
  %v283 = vld [vmem:[%s2 + $0x8] sm:$0xff]
  %v284 = vld [vmem:[%s2 + $0x10] sm:$0xff]
  %v285 = vld [vmem:[%s2 + $0x18] sm:$0xff]
  %v286 = vld [vmem:[%s2 + $0x20] sm:$0xff]
  %v287 = vld [vmem:[%s2 + $0x28] sm:$0xff]
  %v288 = vld [vmem:[%s2 + $0x30] sm:$0xff]
  %v289 = vld [vmem:[%s2 + $0x38] sm:$0xff]
  %v290 = vld [vmem:[%s2 + $0x40] sm:$0xff]
  %v291 = vld [vmem:[%s2 + $0x48] sm:$0xff]
  %v292 = vld [vmem:[%s2 + $0x50] sm:$0xff]
  %v293 = vld [vmem:[%s2 + $0x58] sm:$0xff]
  %v294 = vld [vmem:[%s2 + $0x60] sm:$0xff]
  %v295 = vld [vmem:[%s2 + $0x68] sm:$0xff]
  %v296 = vld [vmem:[%s2 + $0x70] sm:$0xff]
  %v297 = vld [vmem:[%s2 + $0x78] sm:$0xff]
  %v298 = vld [vmem:[%s2 + $0x80] sm:$0xff]
  %v299 = vld [vmem:[%s2 + $0x88] sm:$0xff]
  %v300 = vld [vmem:[%s2 + $0x90] sm:$0xff]
  %v301 = vld [vmem:[%s2 + $0x98] sm:$0xff]
  %v302 = vld [vmem:[%s2 + $0xa0] sm:$0xff]
  %v303 = vld [vmem:[%s2 + $0xa8] sm:$0xff]
  %v304 = vld [vmem:[%s2 + $0xb0] sm:$0xff]
  %v305 = vld [vmem:[%s2 + $0xb8] sm:$0xff]
  %v306 = vld [vmem:[%s2 + $0xc0] sm:$0xff]
  %v307 = vld [vmem:[%s2 + $0xc8] sm:$0xff]
  %v308 = vld [vmem:[%s2 + $0xd0] sm:$0xff]
  %v309 = vld [vmem:[%s2 + $0xd8] sm:$0xff]
  %v310 = vld [vmem:[%s2 + $0xe0] sm:$0xff]
  %v311 = vld [vmem:[%s2 + $0xe8] sm:$0xff]
  %v312 = vld [vmem:[%s2 + $0xf0] sm:$0xff]
  %v313 = vld [vmem:[%s2 + $0xf8] sm:$0xff]
  %v314 = vld [vmem:[%s2 + $0x100] sm:$0xff]
  %v315 = vld [vmem:[%s2 + $0x108] sm:$0xff]
  %v316 = vld [vmem:[%s2 + $0x110] sm:$0xff]
  %v317 = vld [vmem:[%s2 + $0x118] sm:$0xff]
  %v318 = vld [vmem:[%s2 + $0x120] sm:$0xff]
  %v319 = vld [vmem:[%s2 + $0x128] sm:$0xff]
  %v320 = vld [vmem:[%s2 + $0x130] sm:$0xff]
  %v321 = vld [vmem:[%s2 + $0x138] sm:$0xff]
  %v322 = vld [vmem:[%s2 + $0x140] sm:$0xff]
  %v323 = vld [vmem:[%s2 + $0x148] sm:$0xff]
  %v324 = vld [vmem:[%s2 + $0x150] sm:$0xff]
  %v325 = vld [vmem:[%s2 + $0x158] sm:$0xff]
  %v326 = vld [vmem:[%s2 + $0x160] sm:$0xff]
  %v327 = vld [vmem:[%s2 + $0x168] sm:$0xff]
  %v328 = vld [vmem:[%s2 + $0x170] sm:$0xff]
  %v329 = vld [vmem:[%s2 + $0x178] sm:$0xff]
  %v330 = vld [vmem:[%s2 + $0x180] sm:$0xff]
  %v331 = vld [vmem:[%s2 + $0x188] sm:$0xff]
  %v332 = vld [vmem:[%s2 + $0x190] sm:$0xff]
  %v333 = vld [vmem:[%s2 + $0x198] sm:$0xff]
  %v334 = vld [vmem:[%s2 + $0x1a0] sm:$0xff]
  %v335 = vld [vmem:[%s2 + $0x1a8] sm:$0xff]
  %v336 = vld [vmem:[%s2 + $0x1b0] sm:$0xff]
  %v337 = vld [vmem:[%s2 + $0x1b8] sm:$0xff]
  %v338 = vld [vmem:[%s2 + $0x1c0] sm:$0xff]
  %v339 = vld [vmem:[%s2 + $0x1c8] sm:$0xff]
  %v340 = vld [vmem:[%s2 + $0x1d0] sm:$0xff]
  %v341 = vld [vmem:[%s2 + $0x1d8] sm:$0xff]
  %v342 = vld [vmem:[%s2 + $0x1e0] sm:$0xff]
  %v343 = vld [vmem:[%s2 + $0x1e8] sm:$0xff]
  %v344 = vld [vmem:[%s2 + $0x1f0] sm:$0xff]
  %v345 = vld [vmem:[%s2 + $0x1f8] sm:$0xff]
  %v346 = vld [vmem:[#allocation3] sm:$0xff]
  %v347 = vld [vmem:[#allocation4] sm:$0xff]
  %v348 = vld [vmem:[#allocation2] sm:$0xff]
  %v349 = vld [vmem:[#allocation2 + $0x8] sm:$0xff]
  %v350 = vld [vmem:[#allocation2 + $0x10] sm:$0xff]
  %v351 = vld [vmem:[#allocation2 + $0x18] sm:$0xff]
  %352 = vmatpush.msra.mxu0 %v342
  %353 = vmatpush.msra.mxu0 %v338
  %354 = vmatpush.msra.mxu0 %v334
  %355 = vmatpush.msra.mxu0 %v330
  %356 = vmatpush.msra.mxu0 %v326
  %357 = vmatpush.msra.mxu0 %v322
  %358 = vmatpush.msra.mxu0 %v318
  %359 = vmatpush.msra.mxu0 %v314
  %360 = vmatpush.msra.mxu0 %v310
  %361 = vmatpush.msra.mxu0 %v306
  %362 = vmatpush.msra.mxu0 %v302
  %363 = vmatpush.msra.mxu0 %v298
  %364 = vmatpush.msra.mxu0 %v294
  %365 = vmatpush.msra.mxu0 %v290
  %366 = vmatpush.msra.mxu0 %v286
  %367 = vmatpush.msra.mxu0 %v282
  %368 = vmatmul.f32.gmra.mxu0 %v346
  %v369 = vpop.f32.mrf.mxu0
  %v370 = vadd.f32 0.0, %v369
  %371 = vdwg.mxu0
  %372 = vmatpush.msra.mxu0 %v343
  %373 = vmatpush.msra.mxu0 %v339
  %374 = vmatpush.msra.mxu0 %v335
  %375 = vmatpush.msra.mxu0 %v331
  %376 = vmatpush.msra.mxu0 %v327
  %377 = vmatpush.msra.mxu0 %v323
  %378 = vmatpush.msra.mxu0 %v319
  %379 = vmatpush.msra.mxu0 %v315
  %380 = vmatpush.msra.mxu0 %v311
  %381 = vmatpush.msra.mxu0 %v307
  %382 = vmatpush.msra.mxu0 %v303
  %383 = vmatpush.msra.mxu0 %v299
  %384 = vmatpush.msra.mxu0 %v295
  %385 = vmatpush.msra.mxu0 %v291
  %386 = vmatpush.msra.mxu0 %v287
  %387 = vmatpush.msra.mxu0 %v283
  %388 = vmatmul.f32.gmra.mxu0 %v346
  %v389 = vpop.f32.mrf.mxu0
  %v390 = vadd.f32 0.0, %v389
  %391 = vdwg.mxu0
  %392 = vmatpush.msra.mxu0 %v344
  %393 = vmatpush.msra.mxu0 %v340
  %394 = vmatpush.msra.mxu0 %v336
  %395 = vmatpush.msra.mxu0 %v332
  %396 = vmatpush.msra.mxu0 %v328
  %397 = vmatpush.msra.mxu0 %v324
  %398 = vmatpush.msra.mxu0 %v320
  %399 = vmatpush.msra.mxu0 %v316
  %400 = vmatpush.msra.mxu0 %v312
  %401 = vmatpush.msra.mxu0 %v308
  %402 = vmatpush.msra.mxu0 %v304
  %403 = vmatpush.msra.mxu0 %v300
  %404 = vmatpush.msra.mxu0 %v296
  %405 = vmatpush.msra.mxu0 %v292
  %406 = vmatpush.msra.mxu0 %v288
  %407 = vmatpush.msra.mxu0 %v284
  %408 = vmatmul.f32.gmra.mxu0 %v346
  %v409 = vpop.f32.mrf.mxu0
  %v410 = vadd.f32 0.0, %v409
  %411 = vdwg.mxu0
  %412 = vmatpush.msra.mxu0 %v345
  %413 = vmatpush.msra.mxu0 %v341
  %414 = vmatpush.msra.mxu0 %v337
  %415 = vmatpush.msra.mxu0 %v333
  %416 = vmatpush.msra.mxu0 %v329
  %417 = vmatpush.msra.mxu0 %v325
  %418 = vmatpush.msra.mxu0 %v321
  %419 = vmatpush.msra.mxu0 %v317
  %420 = vmatpush.msra.mxu0 %v313
  %421 = vmatpush.msra.mxu0 %v309
  %422 = vmatpush.msra.mxu0 %v305
  %423 = vmatpush.msra.mxu0 %v301
  %424 = vmatpush.msra.mxu0 %v297
  %425 = vmatpush.msra.mxu0 %v293
  %426 = vmatpush.msra.mxu0 %v289
  %427 = vmatpush.msra.mxu0 %v285
  %428 = vmatmul.f32.gmra.mxu0 %v346
  %v429 = vpop.f32.mrf.mxu0
  %v430 = vadd.f32 0.0, %v429
  %431 = vdwg.mxu0
  %v432 = vadd.f32 %v348, %v370
  %v433 = vadd.f32 %v349, %v390
  %v434 = vadd.f32 %v350, %v410
  %v435 = vadd.f32 %v351, %v430
  %v436 = vmul.f32 %v432, 0.5
  %v437 = vtanh.pop %v436
  %v438 = vmul.f32 %v437, 0.5
  %v439 = vadd.f32 %v438, 0.5
  %v440 = vmul.f32 %v433, 0.5
  %v441 = vtanh.pop %v440
  %v442 = vmul.f32 %v441, 0.5
  %v443 = vadd.f32 %v442, 0.5
  %v444 = vtanh.pop %v434
  %v445 = vmul.f32 %v435, 0.5
  %v446 = vtanh.pop %v445
  %v447 = vmul.f32 %v446, 0.5
  %v448 = vadd.f32 %v447, 0.5
  %v449 = vmul.f32 %v443, %v347
  %v450 = vmul.f32 %v439, %v444
  %v451 = vadd.f32 %v449, %v450
  %v452 = vtanh.pop %v451
  %v453 = vmul.f32 %v448, %v452
  %s454 = scalar_lea.vmem [#allocation2], 32
  %v455 = vld [vmem:[%s454] sm:$0xff]
  %v456 = vld [vmem:[%s454 + $0x8] sm:$0xff]
  %v457 = vld [vmem:[%s454 + $0x10] sm:$0xff]
  %v458 = vld [vmem:[%s454 + $0x18] sm:$0xff]
  %459 = vmatpush.msra.mxu0 %v342
  %460 = vmatpush.msra.mxu0 %v338
  %461 = vmatpush.msra.mxu0 %v334
  %462 = vmatpush.msra.mxu0 %v330
  %463 = vmatpush.msra.mxu0 %v326
  %464 = vmatpush.msra.mxu0 %v322
  %465 = vmatpush.msra.mxu0 %v318
  %466 = vmatpush.msra.mxu0 %v314
  %467 = vmatpush.msra.mxu0 %v310
  %468 = vmatpush.msra.mxu0 %v306
  %469 = vmatpush.msra.mxu0 %v302
  %470 = vmatpush.msra.mxu0 %v298
  %471 = vmatpush.msra.mxu0 %v294
  %472 = vmatpush.msra.mxu0 %v290
  %473 = vmatpush.msra.mxu0 %v286
  %474 = vmatpush.msra.mxu0 %v282
  %475 = vmatmul.f32.gmra.mxu0 %v453
  %v476 = vpop.f32.mrf.mxu0
  %v477 = vadd.f32 0.0, %v476
  %478 = vdwg.mxu0
  %479 = vmatpush.msra.mxu0 %v343
  %480 = vmatpush.msra.mxu0 %v339
  %481 = vmatpush.msra.mxu0 %v335
  %482 = vmatpush.msra.mxu0 %v331
  %483 = vmatpush.msra.mxu0 %v327
  %484 = vmatpush.msra.mxu0 %v323
  %485 = vmatpush.msra.mxu0 %v319
  %486 = vmatpush.msra.mxu0 %v315
  %487 = vmatpush.msra.mxu0 %v311
  %488 = vmatpush.msra.mxu0 %v307
  %489 = vmatpush.msra.mxu0 %v303
  %490 = vmatpush.msra.mxu0 %v299
  %491 = vmatpush.msra.mxu0 %v295
  %492 = vmatpush.msra.mxu0 %v291
  %493 = vmatpush.msra.mxu0 %v287
  %494 = vmatpush.msra.mxu0 %v283
  %495 = vmatmul.f32.gmra.mxu0 %v453
  %v496 = vpop.f32.mrf.mxu0
  %v497 = vadd.f32 0.0, %v496
  %498 = vdwg.mxu0
  %499 = vmatpush.msra.mxu0 %v344
  %500 = vmatpush.msra.mxu0 %v340
  %501 = vmatpush.msra.mxu0 %v336
  %502 = vmatpush.msra.mxu0 %v332
  %503 = vmatpush.msra.mxu0 %v328
  %504 = vmatpush.msra.mxu0 %v324
  %505 = vmatpush.msra.mxu0 %v320
  %506 = vmatpush.msra.mxu0 %v316
  %507 = vmatpush.msra.mxu0 %v312
  %508 = vmatpush.msra.mxu0 %v308
  %509 = vmatpush.msra.mxu0 %v304
  %510 = vmatpush.msra.mxu0 %v300
  %511 = vmatpush.msra.mxu0 %v296
  %512 = vmatpush.msra.mxu0 %v292
  %513 = vmatpush.msra.mxu0 %v288
  %514 = vmatpush.msra.mxu0 %v284
  %515 = vmatmul.f32.gmra.mxu0 %v453
  %v516 = vpop.f32.mrf.mxu0
  %v517 = vadd.f32 0.0, %v516
  %518 = vdwg.mxu0
  %519 = vmatpush.msra.mxu0 %v345
  %520 = vmatpush.msra.mxu0 %v341
  %521 = vmatpush.msra.mxu0 %v337
  %522 = vmatpush.msra.mxu0 %v333
  %523 = vmatpush.msra.mxu0 %v329
  %524 = vmatpush.msra.mxu0 %v325
  %525 = vmatpush.msra.mxu0 %v321
  %526 = vmatpush.msra.mxu0 %v317
  %527 = vmatpush.msra.mxu0 %v313
  %528 = vmatpush.msra.mxu0 %v309
  %529 = vmatpush.msra.mxu0 %v305
  %530 = vmatpush.msra.mxu0 %v301
  %531 = vmatpush.msra.mxu0 %v297
  %532 = vmatpush.msra.mxu0 %v293
  %533 = vmatpush.msra.mxu0 %v289
  %534 = vmatpush.msra.mxu0 %v285
  %535 = vmatmul.f32.gmra.mxu0 %v453
  %v536 = vpop.f32.mrf.mxu0
  %v537 = vadd.f32 0.0, %v536
  %538 = vdwg.mxu0
  %v539 = vadd.f32 %v455, %v477
  %v540 = vadd.f32 %v456, %v497
  %v541 = vadd.f32 %v457, %v517
  %v542 = vadd.f32 %v458, %v537
  %v543 = vmul.f32 %v539, 0.5
  %v544 = vtanh.pop %v543
  %v545 = vmul.f32 %v544, 0.5
  %v546 = vadd.f32 %v545, 0.5
  %v547 = vmul.f32 %v540, 0.5
  %v548 = vtanh.pop %v547
  %v549 = vmul.f32 %v548, 0.5
  %v550 = vadd.f32 %v549, 0.5
  %v551 = vtanh.pop %v541
  %v552 = vmul.f32 %v542, 0.5
  %v553 = vtanh.pop %v552
  %v554 = vmul.f32 %v553, 0.5
  %v555 = vadd.f32 %v554, 0.5
  %v556 = vmul.f32 %v550, %v451
  %v557 = vmul.f32 %v546, %v551
  %v558 = vadd.f32 %v556, %v557
  %v559 = vtanh.pop %v558
  %v560 = vmul.f32 %v555, %v559
  %s561 = scalar_lea.vmem [#allocation2], 64
  %v562 = vld [vmem:[%s561] sm:$0xff]
  %v563 = vld [vmem:[%s561 + $0x8] sm:$0xff]
  %v564 = vld [vmem:[%s561 + $0x10] sm:$0xff]
  %v565 = vld [vmem:[%s561 + $0x18] sm:$0xff]
  %566 = vmatpush.msra.mxu0 %v342
  %567 = vmatpush.msra.mxu0 %v338
  %568 = vmatpush.msra.mxu0 %v334
  %569 = vmatpush.msra.mxu0 %v330
  %570 = vmatpush.msra.mxu0 %v326
  %571 = vmatpush.msra.mxu0 %v322
  %572 = vmatpush.msra.mxu0 %v318
  %573 = vmatpush.msra.mxu0 %v314
  %574 = vmatpush.msra.mxu0 %v310
  %575 = vmatpush.msra.mxu0 %v306
  %576 = vmatpush.msra.mxu0 %v302
  %577 = vmatpush.msra.mxu0 %v298
  %578 = vmatpush.msra.mxu0 %v294
  %579 = vmatpush.msra.mxu0 %v290
  %580 = vmatpush.msra.mxu0 %v286
  %581 = vmatpush.msra.mxu0 %v282
  %582 = vmatmul.f32.gmra.mxu0 %v560
  %v583 = vpop.f32.mrf.mxu0
  %v584 = vadd.f32 0.0, %v583
  %585 = vdwg.mxu0
  %586 = vmatpush.msra.mxu0 %v343
  %587 = vmatpush.msra.mxu0 %v339
  %588 = vmatpush.msra.mxu0 %v335
  %589 = vmatpush.msra.mxu0 %v331
  %590 = vmatpush.msra.mxu0 %v327
  %591 = vmatpush.msra.mxu0 %v323
  %592 = vmatpush.msra.mxu0 %v319
  %593 = vmatpush.msra.mxu0 %v315
  %594 = vmatpush.msra.mxu0 %v311
  %595 = vmatpush.msra.mxu0 %v307
  %596 = vmatpush.msra.mxu0 %v303
  %597 = vmatpush.msra.mxu0 %v299
  %598 = vmatpush.msra.mxu0 %v295
  %599 = vmatpush.msra.mxu0 %v291
  %600 = vmatpush.msra.mxu0 %v287
  %601 = vmatpush.msra.mxu0 %v283
  %602 = vmatmul.f32.gmra.mxu0 %v560
  %v603 = vpop.f32.mrf.mxu0
  %v604 = vadd.f32 0.0, %v603
  %605 = vdwg.mxu0
  %606 = vmatpush.msra.mxu0 %v344
  %607 = vmatpush.msra.mxu0 %v340
  %608 = vmatpush.msra.mxu0 %v336
  %609 = vmatpush.msra.mxu0 %v332
  %610 = vmatpush.msra.mxu0 %v328
  %611 = vmatpush.msra.mxu0 %v324
  %612 = vmatpush.msra.mxu0 %v320
  %613 = vmatpush.msra.mxu0 %v316
  %614 = vmatpush.msra.mxu0 %v312
  %615 = vmatpush.msra.mxu0 %v308
  %616 = vmatpush.msra.mxu0 %v304
  %617 = vmatpush.msra.mxu0 %v300
  %618 = vmatpush.msra.mxu0 %v296
  %619 = vmatpush.msra.mxu0 %v292
  %620 = vmatpush.msra.mxu0 %v288
  %621 = vmatpush.msra.mxu0 %v284
  %622 = vmatmul.f32.gmra.mxu0 %v560
  %v623 = vpop.f32.mrf.mxu0
  %v624 = vadd.f32 0.0, %v623
  %625 = vdwg.mxu0
  %626 = vmatpush.msra.mxu0 %v345
  %627 = vmatpush.msra.mxu0 %v341
  %628 = vmatpush.msra.mxu0 %v337
  %629 = vmatpush.msra.mxu0 %v333
  %630 = vmatpush.msra.mxu0 %v329
  %631 = vmatpush.msra.mxu0 %v325
  %632 = vmatpush.msra.mxu0 %v321
  %633 = vmatpush.msra.mxu0 %v317
  %634 = vmatpush.msra.mxu0 %v313
  %635 = vmatpush.msra.mxu0 %v309
  %636 = vmatpush.msra.mxu0 %v305
  %637 = vmatpush.msra.mxu0 %v301
  %638 = vmatpush.msra.mxu0 %v297
  %639 = vmatpush.msra.mxu0 %v293
  %640 = vmatpush.msra.mxu0 %v289
  %641 = vmatpush.msra.mxu0 %v285
  %642 = vmatmul.f32.gmra.mxu0 %v560
  %v643 = vpop.f32.mrf.mxu0
  %v644 = vadd.f32 0.0, %v643
  %645 = vdwg.mxu0
  %v646 = vadd.f32 %v562, %v584
  %v647 = vadd.f32 %v563, %v604
  %v648 = vadd.f32 %v564, %v624
  %v649 = vadd.f32 %v565, %v644
  %v650 = vmul.f32 %v646, 0.5
  %v651 = vtanh.pop %v650
  %v652 = vmul.f32 %v651, 0.5
  %v653 = vadd.f32 %v652, 0.5
  %v654 = vmul.f32 %v647, 0.5
  %v655 = vtanh.pop %v654
  %v656 = vmul.f32 %v655, 0.5
  %v657 = vadd.f32 %v656, 0.5
  %v658 = vtanh.pop %v648
  %v659 = vmul.f32 %v649, 0.5
  %v660 = vtanh.pop %v659
  %v661 = vmul.f32 %v660, 0.5
  %v662 = vadd.f32 %v661, 0.5
  %v663 = vmul.f32 %v657, %v558
  %v664 = vmul.f32 %v653, %v658
  %v665 = vadd.f32 %v663, %v664
  %v666 = vtanh.pop %v665
  %v667 = vmul.f32 %v662, %v666
  %s668 = scalar_lea.vmem [#allocation2], 96
  %v669 = vld [vmem:[%s668] sm:$0xff]
  %v670 = vld [vmem:[%s668 + $0x8] sm:$0xff]
  %v671 = vld [vmem:[%s668 + $0x10] sm:$0xff]
  %v672 = vld [vmem:[%s668 + $0x18] sm:$0xff]
  %673 = vmatpush.msra.mxu0 %v342
  %674 = vmatpush.msra.mxu0 %v338
  %675 = vmatpush.msra.mxu0 %v334
  %676 = vmatpush.msra.mxu0 %v330
  %677 = vmatpush.msra.mxu0 %v326
  %678 = vmatpush.msra.mxu0 %v322
  %679 = vmatpush.msra.mxu0 %v318
  %680 = vmatpush.msra.mxu0 %v314
  %681 = vmatpush.msra.mxu0 %v310
  %682 = vmatpush.msra.mxu0 %v306
  %683 = vmatpush.msra.mxu0 %v302
  %684 = vmatpush.msra.mxu0 %v298
  %685 = vmatpush.msra.mxu0 %v294
  %686 = vmatpush.msra.mxu0 %v290
  %687 = vmatpush.msra.mxu0 %v286
  %688 = vmatpush.msra.mxu0 %v282
  %689 = vmatmul.f32.gmra.mxu0 %v667
  %v690 = vpop.f32.mrf.mxu0
  %v691 = vadd.f32 0.0, %v690
  %692 = vdwg.mxu0
  %693 = vmatpush.msra.mxu0 %v343
  %694 = vmatpush.msra.mxu0 %v339
  %695 = vmatpush.msra.mxu0 %v335
  %696 = vmatpush.msra.mxu0 %v331
  %697 = vmatpush.msra.mxu0 %v327
  %698 = vmatpush.msra.mxu0 %v323
  %699 = vmatpush.msra.mxu0 %v319
  %700 = vmatpush.msra.mxu0 %v315
  %701 = vmatpush.msra.mxu0 %v311
  %702 = vmatpush.msra.mxu0 %v307
  %703 = vmatpush.msra.mxu0 %v303
  %704 = vmatpush.msra.mxu0 %v299
  %705 = vmatpush.msra.mxu0 %v295
  %706 = vmatpush.msra.mxu0 %v291
  %707 = vmatpush.msra.mxu0 %v287
  %708 = vmatpush.msra.mxu0 %v283
  %709 = vmatmul.f32.gmra.mxu0 %v667
  %v710 = vpop.f32.mrf.mxu0
  %v711 = vadd.f32 0.0, %v710
  %712 = vdwg.mxu0
  %713 = vmatpush.msra.mxu0 %v344
  %714 = vmatpush.msra.mxu0 %v340
  %715 = vmatpush.msra.mxu0 %v336
  %716 = vmatpush.msra.mxu0 %v332
  %717 = vmatpush.msra.mxu0 %v328
  %718 = vmatpush.msra.mxu0 %v324
  %719 = vmatpush.msra.mxu0 %v320
  %720 = vmatpush.msra.mxu0 %v316
  %721 = vmatpush.msra.mxu0 %v312
  %722 = vmatpush.msra.mxu0 %v308
  %723 = vmatpush.msra.mxu0 %v304
  %724 = vmatpush.msra.mxu0 %v300
  %725 = vmatpush.msra.mxu0 %v296
  %726 = vmatpush.msra.mxu0 %v292
  %727 = vmatpush.msra.mxu0 %v288
  %728 = vmatpush.msra.mxu0 %v284
  %729 = vmatmul.f32.gmra.mxu0 %v667
  %v730 = vpop.f32.mrf.mxu0
  %v731 = vadd.f32 0.0, %v730
  %732 = vdwg.mxu0
  %733 = vmatpush.msra.mxu0 %v345
  %734 = vmatpush.msra.mxu0 %v341
  %735 = vmatpush.msra.mxu0 %v337
  %736 = vmatpush.msra.mxu0 %v333
  %737 = vmatpush.msra.mxu0 %v329
  %738 = vmatpush.msra.mxu0 %v325
  %739 = vmatpush.msra.mxu0 %v321
  %740 = vmatpush.msra.mxu0 %v317
  %741 = vmatpush.msra.mxu0 %v313
  %742 = vmatpush.msra.mxu0 %v309
  %743 = vmatpush.msra.mxu0 %v305
  %744 = vmatpush.msra.mxu0 %v301
  %745 = vmatpush.msra.mxu0 %v297
  %746 = vmatpush.msra.mxu0 %v293
  %747 = vmatpush.msra.mxu0 %v289
  %748 = vmatpush.msra.mxu0 %v285
  %749 = vmatmul.f32.gmra.mxu0 %v667
  %v750 = vpop.f32.mrf.mxu0
  %v751 = vadd.f32 0.0, %v750
  %752 = vdwg.mxu0
  %v753 = vadd.f32 %v669, %v691
  %v754 = vadd.f32 %v670, %v711
  %v755 = vadd.f32 %v671, %v731
  %v756 = vadd.f32 %v672, %v751
  %v757 = vmul.f32 %v753, 0.5
  %v758 = vtanh.pop %v757
  %v759 = vmul.f32 %v758, 0.5
  %v760 = vadd.f32 %v759, 0.5
  %v761 = vmul.f32 %v754, 0.5
  %v762 = vtanh.pop %v761
  %v763 = vmul.f32 %v762, 0.5
  %v764 = vadd.f32 %v763, 0.5
  %v765 = vtanh.pop %v755
  %v766 = vmul.f32 %v756, 0.5
  %v767 = vtanh.pop %v766
  %v768 = vmul.f32 %v767, 0.5
  %v769 = vadd.f32 %v768, 0.5
  %v770 = vmul.f32 %v764, %v665
  %v771 = vmul.f32 %v760, %v765
  %v772 = vadd.f32 %v770, %v771
  %v773 = vtanh.pop %v772
  %v774 = vmul.f32 %v769, %v773
  %s775 = scalar_lea.vmem [#allocation2], 128
  %v776 = vld [vmem:[%s775] sm:$0xff]
  %v777 = vld [vmem:[%s775 + $0x8] sm:$0xff]
  %v778 = vld [vmem:[%s775 + $0x10] sm:$0xff]
  %v779 = vld [vmem:[%s775 + $0x18] sm:$0xff]
  %780 = vmatpush.msra.mxu0 %v342
  %781 = vmatpush.msra.mxu0 %v338
  %782 = vmatpush.msra.mxu0 %v334
  %783 = vmatpush.msra.mxu0 %v330
  %784 = vmatpush.msra.mxu0 %v326
  %785 = vmatpush.msra.mxu0 %v322
  %786 = vmatpush.msra.mxu0 %v318
  %787 = vmatpush.msra.mxu0 %v314
  %788 = vmatpush.msra.mxu0 %v310
  %789 = vmatpush.msra.mxu0 %v306
  %790 = vmatpush.msra.mxu0 %v302
  %791 = vmatpush.msra.mxu0 %v298
  %792 = vmatpush.msra.mxu0 %v294
  %793 = vmatpush.msra.mxu0 %v290
  %794 = vmatpush.msra.mxu0 %v286
  %795 = vmatpush.msra.mxu0 %v282
  %796 = vmatmul.f32.gmra.mxu0 %v774
  %v797 = vpop.f32.mrf.mxu0
  %v798 = vadd.f32 0.0, %v797
  %799 = vdwg.mxu0
  %800 = vmatpush.msra.mxu0 %v343
  %801 = vmatpush.msra.mxu0 %v339
  %802 = vmatpush.msra.mxu0 %v335
  %803 = vmatpush.msra.mxu0 %v331
  %804 = vmatpush.msra.mxu0 %v327
  %805 = vmatpush.msra.mxu0 %v323
  %806 = vmatpush.msra.mxu0 %v319
  %807 = vmatpush.msra.mxu0 %v315
  %808 = vmatpush.msra.mxu0 %v311
  %809 = vmatpush.msra.mxu0 %v307
  %810 = vmatpush.msra.mxu0 %v303
  %811 = vmatpush.msra.mxu0 %v299
  %812 = vmatpush.msra.mxu0 %v295
  %813 = vmatpush.msra.mxu0 %v291
  %814 = vmatpush.msra.mxu0 %v287
  %815 = vmatpush.msra.mxu0 %v283
  %816 = vmatmul.f32.gmra.mxu0 %v774
  %v817 = vpop.f32.mrf.mxu0
  %v818 = vadd.f32 0.0, %v817
  %819 = vdwg.mxu0
  %820 = vmatpush.msra.mxu0 %v344
  %821 = vmatpush.msra.mxu0 %v340
  %822 = vmatpush.msra.mxu0 %v336
  %823 = vmatpush.msra.mxu0 %v332
  %824 = vmatpush.msra.mxu0 %v328
  %825 = vmatpush.msra.mxu0 %v324
  %826 = vmatpush.msra.mxu0 %v320
  %827 = vmatpush.msra.mxu0 %v316
  %828 = vmatpush.msra.mxu0 %v312
  %829 = vmatpush.msra.mxu0 %v308
  %830 = vmatpush.msra.mxu0 %v304
  %831 = vmatpush.msra.mxu0 %v300
  %832 = vmatpush.msra.mxu0 %v296
  %833 = vmatpush.msra.mxu0 %v292
  %834 = vmatpush.msra.mxu0 %v288
  %835 = vmatpush.msra.mxu0 %v284
  %836 = vmatmul.f32.gmra.mxu0 %v774
  %v837 = vpop.f32.mrf.mxu0
  %v838 = vadd.f32 0.0, %v837
  %839 = vdwg.mxu0
  %840 = vmatpush.msra.mxu0 %v345
  %841 = vmatpush.msra.mxu0 %v341
  %842 = vmatpush.msra.mxu0 %v337
  %843 = vmatpush.msra.mxu0 %v333
  %844 = vmatpush.msra.mxu0 %v329
  %845 = vmatpush.msra.mxu0 %v325
  %846 = vmatpush.msra.mxu0 %v321
  %847 = vmatpush.msra.mxu0 %v317
  %848 = vmatpush.msra.mxu0 %v313
  %849 = vmatpush.msra.mxu0 %v309
  %850 = vmatpush.msra.mxu0 %v305
  %851 = vmatpush.msra.mxu0 %v301
  %852 = vmatpush.msra.mxu0 %v297
  %853 = vmatpush.msra.mxu0 %v293
  %854 = vmatpush.msra.mxu0 %v289
  %855 = vmatpush.msra.mxu0 %v285
  %856 = vmatmul.f32.gmra.mxu0 %v774
  %v857 = vpop.f32.mrf.mxu0
  %v858 = vadd.f32 0.0, %v857
  %859 = vdwg.mxu0
  %v860 = vadd.f32 %v776, %v798
  %v861 = vadd.f32 %v777, %v818
  %v862 = vadd.f32 %v778, %v838
  %v863 = vadd.f32 %v779, %v858
  %v864 = vmul.f32 %v860, 0.5
  %v865 = vtanh.pop %v864
  %v866 = vmul.f32 %v865, 0.5
  %v867 = vadd.f32 %v866, 0.5
  %v868 = vmul.f32 %v861, 0.5
  %v869 = vtanh.pop %v868
  %v870 = vmul.f32 %v869, 0.5
  %v871 = vadd.f32 %v870, 0.5
  %v872 = vtanh.pop %v862
  %v873 = vmul.f32 %v863, 0.5
  %v874 = vtanh.pop %v873
  %v875 = vmul.f32 %v874, 0.5
  %v876 = vadd.f32 %v875, 0.5
  %v877 = vmul.f32 %v871, %v772
  %v878 = vmul.f32 %v867, %v872
  %v879 = vadd.f32 %v877, %v878
  %v880 = vtanh.pop %v879
  %v881 = vmul.f32 %v876, %v880
  %s882 = scalar_lea.vmem [#allocation2], 160
  %v883 = vld [vmem:[%s882] sm:$0xff]
  %v884 = vld [vmem:[%s882 + $0x8] sm:$0xff]
  %v885 = vld [vmem:[%s882 + $0x10] sm:$0xff]
  %v886 = vld [vmem:[%s882 + $0x18] sm:$0xff]
  %887 = vmatpush.msra.mxu0 %v342
  %888 = vmatpush.msra.mxu0 %v338
  %889 = vmatpush.msra.mxu0 %v334
  %890 = vmatpush.msra.mxu0 %v330
  %891 = vmatpush.msra.mxu0 %v326
  %892 = vmatpush.msra.mxu0 %v322
  %893 = vmatpush.msra.mxu0 %v318
  %894 = vmatpush.msra.mxu0 %v314
  %895 = vmatpush.msra.mxu0 %v310
  %896 = vmatpush.msra.mxu0 %v306
  %897 = vmatpush.msra.mxu0 %v302
  %898 = vmatpush.msra.mxu0 %v298
  %899 = vmatpush.msra.mxu0 %v294
  %900 = vmatpush.msra.mxu0 %v290
  %901 = vmatpush.msra.mxu0 %v286
  %902 = vmatpush.msra.mxu0 %v282
  %903 = vmatmul.f32.gmra.mxu0 %v881
  %v904 = vpop.f32.mrf.mxu0
  %v905 = vadd.f32 0.0, %v904
  %906 = vdwg.mxu0
  %907 = vmatpush.msra.mxu0 %v343
  %908 = vmatpush.msra.mxu0 %v339
  %909 = vmatpush.msra.mxu0 %v335
  %910 = vmatpush.msra.mxu0 %v331
  %911 = vmatpush.msra.mxu0 %v327
  %912 = vmatpush.msra.mxu0 %v323
  %913 = vmatpush.msra.mxu0 %v319
  %914 = vmatpush.msra.mxu0 %v315
  %915 = vmatpush.msra.mxu0 %v311
  %916 = vmatpush.msra.mxu0 %v307
  %917 = vmatpush.msra.mxu0 %v303
  %918 = vmatpush.msra.mxu0 %v299
  %919 = vmatpush.msra.mxu0 %v295
  %920 = vmatpush.msra.mxu0 %v291
  %921 = vmatpush.msra.mxu0 %v287
  %922 = vmatpush.msra.mxu0 %v283
  %923 = vmatmul.f32.gmra.mxu0 %v881
  %v924 = vpop.f32.mrf.mxu0
  %v925 = vadd.f32 0.0, %v924
  %926 = vdwg.mxu0
  %927 = vmatpush.msra.mxu0 %v344
  %928 = vmatpush.msra.mxu0 %v340
  %929 = vmatpush.msra.mxu0 %v336
  %930 = vmatpush.msra.mxu0 %v332
  %931 = vmatpush.msra.mxu0 %v328
  %932 = vmatpush.msra.mxu0 %v324
  %933 = vmatpush.msra.mxu0 %v320
  %934 = vmatpush.msra.mxu0 %v316
  %935 = vmatpush.msra.mxu0 %v312
  %936 = vmatpush.msra.mxu0 %v308
  %937 = vmatpush.msra.mxu0 %v304
  %938 = vmatpush.msra.mxu0 %v300
  %939 = vmatpush.msra.mxu0 %v296
  %940 = vmatpush.msra.mxu0 %v292
  %941 = vmatpush.msra.mxu0 %v288
  %942 = vmatpush.msra.mxu0 %v284
  %943 = vmatmul.f32.gmra.mxu0 %v881
  %v944 = vpop.f32.mrf.mxu0
  %v945 = vadd.f32 0.0, %v944
  %946 = vdwg.mxu0
  %947 = vmatpush.msra.mxu0 %v345
  %948 = vmatpush.msra.mxu0 %v341
  %949 = vmatpush.msra.mxu0 %v337
  %950 = vmatpush.msra.mxu0 %v333
  %951 = vmatpush.msra.mxu0 %v329
  %952 = vmatpush.msra.mxu0 %v325
  %953 = vmatpush.msra.mxu0 %v321
  %954 = vmatpush.msra.mxu0 %v317
  %955 = vmatpush.msra.mxu0 %v313
  %956 = vmatpush.msra.mxu0 %v309
  %957 = vmatpush.msra.mxu0 %v305
  %958 = vmatpush.msra.mxu0 %v301
  %959 = vmatpush.msra.mxu0 %v297
  %960 = vmatpush.msra.mxu0 %v293
  %961 = vmatpush.msra.mxu0 %v289
  %962 = vmatpush.msra.mxu0 %v285
  %963 = vmatmul.f32.gmra.mxu0 %v881
  %v964 = vpop.f32.mrf.mxu0
  %v965 = vadd.f32 0.0, %v964
  %966 = vdwg.mxu0
  %v967 = vadd.f32 %v883, %v905
  %v968 = vadd.f32 %v884, %v925
  %v969 = vadd.f32 %v885, %v945
  %v970 = vadd.f32 %v886, %v965
  %v971 = vmul.f32 %v967, 0.5
  %v972 = vtanh.pop %v971
  %v973 = vmul.f32 %v972, 0.5
  %v974 = vadd.f32 %v973, 0.5
  %v975 = vmul.f32 %v968, 0.5
  %v976 = vtanh.pop %v975
  %v977 = vmul.f32 %v976, 0.5
  %v978 = vadd.f32 %v977, 0.5
  %v979 = vtanh.pop %v969
  %v980 = vmul.f32 %v970, 0.5
  %v981 = vtanh.pop %v980
  %v982 = vmul.f32 %v981, 0.5
  %v983 = vadd.f32 %v982, 0.5
  %v984 = vmul.f32 %v978, %v879
  %v985 = vmul.f32 %v974, %v979
  %v986 = vadd.f32 %v984, %v985
  %v987 = vtanh.pop %v986
  %v988 = vmul.f32 %v983, %v987
  %s989 = scalar_lea.vmem [#allocation2], 192
  %v990 = vld [vmem:[%s989] sm:$0xff]
  %v991 = vld [vmem:[%s989 + $0x8] sm:$0xff]
  %v992 = vld [vmem:[%s989 + $0x10] sm:$0xff]
  %v993 = vld [vmem:[%s989 + $0x18] sm:$0xff]
  %994 = vmatpush.msra.mxu0 %v342
  %995 = vmatpush.msra.mxu0 %v338
  %996 = vmatpush.msra.mxu0 %v334
  %997 = vmatpush.msra.mxu0 %v330
  %998 = vmatpush.msra.mxu0 %v326
  %999 = vmatpush.msra.mxu0 %v322
  %1000 = vmatpush.msra.mxu0 %v318
  %1001 = vmatpush.msra.mxu0 %v314
  %1002 = vmatpush.msra.mxu0 %v310
  %1003 = vmatpush.msra.mxu0 %v306
  %1004 = vmatpush.msra.mxu0 %v302
  %1005 = vmatpush.msra.mxu0 %v298
  %1006 = vmatpush.msra.mxu0 %v294
  %1007 = vmatpush.msra.mxu0 %v290
  %1008 = vmatpush.msra.mxu0 %v286
  %1009 = vmatpush.msra.mxu0 %v282
  %1010 = vmatmul.f32.gmra.mxu0 %v988
  %v1011 = vpop.f32.mrf.mxu0
  %v1012 = vadd.f32 0.0, %v1011
  %1013 = vdwg.mxu0
  %1014 = vmatpush.msra.mxu0 %v343
  %1015 = vmatpush.msra.mxu0 %v339
  %1016 = vmatpush.msra.mxu0 %v335
  %1017 = vmatpush.msra.mxu0 %v331
  %1018 = vmatpush.msra.mxu0 %v327
  %1019 = vmatpush.msra.mxu0 %v323
  %1020 = vmatpush.msra.mxu0 %v319
  %1021 = vmatpush.msra.mxu0 %v315
  %1022 = vmatpush.msra.mxu0 %v311
  %1023 = vmatpush.msra.mxu0 %v307
  %1024 = vmatpush.msra.mxu0 %v303
  %1025 = vmatpush.msra.mxu0 %v299
  %1026 = vmatpush.msra.mxu0 %v295
  %1027 = vmatpush.msra.mxu0 %v291
  %1028 = vmatpush.msra.mxu0 %v287
  %1029 = vmatpush.msra.mxu0 %v283
  %1030 = vmatmul.f32.gmra.mxu0 %v988
  %v1031 = vpop.f32.mrf.mxu0
  %v1032 = vadd.f32 0.0, %v1031
  %1033 = vdwg.mxu0
  %1034 = vmatpush.msra.mxu0 %v344
  %1035 = vmatpush.msra.mxu0 %v340
  %1036 = vmatpush.msra.mxu0 %v336
  %1037 = vmatpush.msra.mxu0 %v332
  %1038 = vmatpush.msra.mxu0 %v328
  %1039 = vmatpush.msra.mxu0 %v324
  %1040 = vmatpush.msra.mxu0 %v320
  %1041 = vmatpush.msra.mxu0 %v316
  %1042 = vmatpush.msra.mxu0 %v312
  %1043 = vmatpush.msra.mxu0 %v308
  %1044 = vmatpush.msra.mxu0 %v304
  %1045 = vmatpush.msra.mxu0 %v300
  %1046 = vmatpush.msra.mxu0 %v296
  %1047 = vmatpush.msra.mxu0 %v292
  %1048 = vmatpush.msra.mxu0 %v288
  %1049 = vmatpush.msra.mxu0 %v284
  %1050 = vmatmul.f32.gmra.mxu0 %v988
  %v1051 = vpop.f32.mrf.mxu0
  %v1052 = vadd.f32 0.0, %v1051
  %1053 = vdwg.mxu0
  %1054 = vmatpush.msra.mxu0 %v345
  %1055 = vmatpush.msra.mxu0 %v341
  %1056 = vmatpush.msra.mxu0 %v337
  %1057 = vmatpush.msra.mxu0 %v333
  %1058 = vmatpush.msra.mxu0 %v329
  %1059 = vmatpush.msra.mxu0 %v325
  %1060 = vmatpush.msra.mxu0 %v321
  %1061 = vmatpush.msra.mxu0 %v317
  %1062 = vmatpush.msra.mxu0 %v313
  %1063 = vmatpush.msra.mxu0 %v309
  %1064 = vmatpush.msra.mxu0 %v305
  %1065 = vmatpush.msra.mxu0 %v301
  %1066 = vmatpush.msra.mxu0 %v297
  %1067 = vmatpush.msra.mxu0 %v293
  %1068 = vmatpush.msra.mxu0 %v289
  %1069 = vmatpush.msra.mxu0 %v285
  %1070 = vmatmul.f32.gmra.mxu0 %v988
  %v1071 = vpop.f32.mrf.mxu0
  %v1072 = vadd.f32 0.0, %v1071
  %1073 = vdwg.mxu0
  %v1074 = vadd.f32 %v990, %v1012
  %v1075 = vadd.f32 %v991, %v1032
  %v1076 = vadd.f32 %v992, %v1052
  %v1077 = vadd.f32 %v993, %v1072
  %v1078 = vmul.f32 %v1074, 0.5
  %v1079 = vtanh.pop %v1078
  %v1080 = vmul.f32 %v1079, 0.5
  %v1081 = vadd.f32 %v1080, 0.5
  %v1082 = vmul.f32 %v1075, 0.5
  %v1083 = vtanh.pop %v1082
  %v1084 = vmul.f32 %v1083, 0.5
  %v1085 = vadd.f32 %v1084, 0.5
  %v1086 = vtanh.pop %v1076
  %v1087 = vmul.f32 %v1077, 0.5
  %v1088 = vtanh.pop %v1087
  %v1089 = vmul.f32 %v1088, 0.5
  %v1090 = vadd.f32 %v1089, 0.5
  %v1091 = vmul.f32 %v1085, %v986
  %v1092 = vmul.f32 %v1081, %v1086
  %v1093 = vadd.f32 %v1091, %v1092
  %v1094 = vtanh.pop %v1093
  %v1095 = vmul.f32 %v1090, %v1094
  %s1096 = scalar_lea.vmem [#allocation2], 224
  %v1097 = vld [vmem:[%s1096] sm:$0xff]
  %v1098 = vld [vmem:[%s1096 + $0x8] sm:$0xff]
  %v1099 = vld [vmem:[%s1096 + $0x10] sm:$0xff]
  %v1100 = vld [vmem:[%s1096 + $0x18] sm:$0xff]
  %1101 = vmatpush.msra.mxu0 %v342
  %1102 = vmatpush.msra.mxu0 %v338
  %1103 = vmatpush.msra.mxu0 %v334
  %1104 = vmatpush.msra.mxu0 %v330
  %1105 = vmatpush.msra.mxu0 %v326
  %1106 = vmatpush.msra.mxu0 %v322
  %1107 = vmatpush.msra.mxu0 %v318
  %1108 = vmatpush.msra.mxu0 %v314
  %1109 = vmatpush.msra.mxu0 %v310
  %1110 = vmatpush.msra.mxu0 %v306
  %1111 = vmatpush.msra.mxu0 %v302
  %1112 = vmatpush.msra.mxu0 %v298
  %1113 = vmatpush.msra.mxu0 %v294
  %1114 = vmatpush.msra.mxu0 %v290
  %1115 = vmatpush.msra.mxu0 %v286
  %1116 = vmatpush.msra.mxu0 %v282
  %1117 = vmatmul.f32.gmra.mxu0 %v1095
  %v1118 = vpop.f32.mrf.mxu0
  %v1119 = vadd.f32 0.0, %v1118
  %1120 = vdwg.mxu0
  %1121 = vmatpush.msra.mxu0 %v343
  %1122 = vmatpush.msra.mxu0 %v339
  %1123 = vmatpush.msra.mxu0 %v335
  %1124 = vmatpush.msra.mxu0 %v331
  %1125 = vmatpush.msra.mxu0 %v327
  %1126 = vmatpush.msra.mxu0 %v323
  %1127 = vmatpush.msra.mxu0 %v319
  %1128 = vmatpush.msra.mxu0 %v315
  %1129 = vmatpush.msra.mxu0 %v311
  %1130 = vmatpush.msra.mxu0 %v307
  %1131 = vmatpush.msra.mxu0 %v303
  %1132 = vmatpush.msra.mxu0 %v299
  %1133 = vmatpush.msra.mxu0 %v295
  %1134 = vmatpush.msra.mxu0 %v291
  %1135 = vmatpush.msra.mxu0 %v287
  %1136 = vmatpush.msra.mxu0 %v283
  %1137 = vmatmul.f32.gmra.mxu0 %v1095
  %v1138 = vpop.f32.mrf.mxu0
  %v1139 = vadd.f32 0.0, %v1138
  %1140 = vdwg.mxu0
  %1141 = vmatpush.msra.mxu0 %v344
  %1142 = vmatpush.msra.mxu0 %v340
  %1143 = vmatpush.msra.mxu0 %v336
  %1144 = vmatpush.msra.mxu0 %v332
  %1145 = vmatpush.msra.mxu0 %v328
  %1146 = vmatpush.msra.mxu0 %v324
  %1147 = vmatpush.msra.mxu0 %v320
  %1148 = vmatpush.msra.mxu0 %v316
  %1149 = vmatpush.msra.mxu0 %v312
  %1150 = vmatpush.msra.mxu0 %v308
  %1151 = vmatpush.msra.mxu0 %v304
  %1152 = vmatpush.msra.mxu0 %v300
  %1153 = vmatpush.msra.mxu0 %v296
  %1154 = vmatpush.msra.mxu0 %v292
  %1155 = vmatpush.msra.mxu0 %v288
  %1156 = vmatpush.msra.mxu0 %v284
  %1157 = vmatmul.f32.gmra.mxu0 %v1095
  %v1158 = vpop.f32.mrf.mxu0
  %v1159 = vadd.f32 0.0, %v1158
  %1160 = vdwg.mxu0
  %1161 = vmatpush.msra.mxu0 %v345
  %1162 = vmatpush.msra.mxu0 %v341
  %1163 = vmatpush.msra.mxu0 %v337
  %1164 = vmatpush.msra.mxu0 %v333
  %1165 = vmatpush.msra.mxu0 %v329
  %1166 = vmatpush.msra.mxu0 %v325
  %1167 = vmatpush.msra.mxu0 %v321
  %1168 = vmatpush.msra.mxu0 %v317
  %1169 = vmatpush.msra.mxu0 %v313
  %1170 = vmatpush.msra.mxu0 %v309
  %1171 = vmatpush.msra.mxu0 %v305
  %1172 = vmatpush.msra.mxu0 %v301
  %1173 = vmatpush.msra.mxu0 %v297
  %1174 = vmatpush.msra.mxu0 %v293
  %1175 = vmatpush.msra.mxu0 %v289
  %1176 = vmatpush.msra.mxu0 %v285
  %1177 = vmatmul.f32.gmra.mxu0 %v1095
  %v1178 = vpop.f32.mrf.mxu0
  %v1179 = vadd.f32 0.0, %v1178
  %1180 = vdwg.mxu0
  %v1181 = vadd.f32 %v1097, %v1119
  %v1182 = vadd.f32 %v1098, %v1139
  %v1183 = vadd.f32 %v1099, %v1159
  %v1184 = vadd.f32 %v1100, %v1179
  %v1185 = vmul.f32 %v1181, 0.5
  %v1186 = vtanh.pop %v1185
  %v1187 = vmul.f32 %v1186, 0.5
  %v1188 = vadd.f32 %v1187, 0.5
  %v1189 = vmul.f32 %v1182, 0.5
  %v1190 = vtanh.pop %v1189
  %v1191 = vmul.f32 %v1190, 0.5
  %v1192 = vadd.f32 %v1191, 0.5
  %v1193 = vtanh.pop %v1183
  %v1194 = vmul.f32 %v1184, 0.5
  %v1195 = vtanh.pop %v1194
  %v1196 = vmul.f32 %v1195, 0.5
  %v1197 = vadd.f32 %v1196, 0.5
  %v1198 = vmul.f32 %v1192, %v1093
  %v1199 = vmul.f32 %v1188, %v1193
  %v1200 = vadd.f32 %v1198, %v1199
  %v1201 = vtanh.pop %v1200
  %v1202 = vmul.f32 %v1197, %v1201
  %1203 = vst [vmem:[#allocation3] sm:$0xff] %v1202
  %1204 = vst [vmem:[#allocation4] sm:$0xff] %v1200
  // Predicated region
  $region22: #{lstm_model_forward.1} parent=0 // pred_check
    %p1205 = pneg %p17
  $region23: #{lstm_model_forward.1} parent=0 // pred_check_branch
    %1207 = sbr.rel (%p1205) target = $region25
  $region24: #{lstm_model_forward.1} parent=0 // pred_region
    %v1208 = vld [vmem:[#allocation3] sm:$0xff]
    %1209 = vst [vmem:[%s4] sm:$0xff] %v1208
  $region25: #{lstm_model_forward.1} parent=0 // pred_fallthru
    _
  // Predicated region
  $region26: #{lstm_model_forward.1} parent=0 // pred_check
    _
  $region27: #{lstm_model_forward.1} parent=0 // pred_check_branch
    %1211 = sbr.rel (0) target = $region29
  $region28: #{lstm_model_forward.1} parent=0 // pred_region
    _
  $region29: #{lstm_model_forward.1} parent=0 // pred_fallthru
    _
  // Predicated region
  $region30: #{lstm_model_forward.1} parent=0 // pred_check
    _
  $region31: #{lstm_model_forward.1} parent=0 // pred_check_branch
    %1213 = sbr.rel (0) target = $region33
  $region32: #{lstm_model_forward.1} parent=0 // pred_region
    _
  $region33: #{lstm_model_forward.1} parent=0 // pred_fallthru
    _

</llo_original>
